<compile_context>
chip_gen: v6e
topology: v6e:2x2x1
jax: 0.10.0
libtpu: 0.0.40
codegen_flags: <defaults>
</compile_context>

<pallas_src>
import jax
import jax.numpy as jnp
from jax.experimental import pallas as pl
from jax.experimental.pallas import tpu as pltpu

FEAT_IN = 784   # 28*28 MNIST features
HID_PAD = 128   # fc4 / out layer padded from 64 -> 128 lanes


def _round_up(n, m):
    return ((n + m - 1) // m) * m


def _make_mlp_kernel(bf16_epilogue):
    def kernel(x_ref,
               w1_ref, b1_ref, w2_ref, b2_ref, w3_ref, b3_ref,
               w4_ref, b4_ref, w5_ref, b5_ref, o_ref):

        def layer(h_bf16, w_ref, b_ref):
            acc = jnp.dot(h_bf16, w_ref[...],
                          preferred_element_type=jnp.float32)
            if bf16_epilogue:
                # v6e/v7x: bf16-native VPU -> bias+ReLU in bf16 halves
                # intermediate spill ld/st bytes.
                return jnp.maximum(
                    acc.astype(jnp.bfloat16) + b_ref[...].astype(jnp.bfloat16),
                    0)
            # v5e and older: no bf16 VALU; keep elementwise math in f32.
            return jnp.maximum(acc + b_ref[...], 0.0).astype(jnp.bfloat16)

        h = x_ref[...].astype(jnp.bfloat16)   # cast in-kernel; no wrapper pass
        h = layer(h, w1_ref, b1_ref)          # 784 -> 512
        h = layer(h, w2_ref, b2_ref)          # 512 -> 256
        h = layer(h, w3_ref, b3_ref)          # 256 -> 128
        h = layer(h, w4_ref, b4_ref)          # 128 -> 128 (zero-padded from 64)
        # out (64 -> 1, zero-padded to 128 lanes): keep off the MXU;
        # broadcast-row multiply (VPU) + lane reduction (XLU).
        logits = jnp.sum(h.astype(jnp.float32) * w5_ref[...],
                         axis=-1, keepdims=True) + b5_ref[...]
        o_ref[...] = jax.nn.sigmoid(logits).astype(o_ref.dtype)

    return kernel


def _auto_bf16_epilogue():
    try:
        kind = jax.devices()[0].device_kind.lower()
    except Exception:
        return False
    # bf16 VPU/EUP only on v6e / v7x; default to the proven f32 path otherwise.
    return ("v6" in kind) or ("v7" in kind)


def d_forward(x, kparams, *, max_tile_b=512, bf16_epilogue=None):
    """x: (B, 784) f32.  kparams: output of prepare_kernel_params()."""
    if bf16_epilogue is None:
        bf16_epilogue = _auto_bf16_epilogue()
    B = x.shape[0]

    # Large tiles amortize per-grid-step overhead; small batches clamp to a
    # single sublane-aligned tile.
    tile_b = min(max_tile_b, _round_up(B, 8))
    num_tiles = pl.cdiv(B, tile_b)

    x_spec = pl.BlockSpec((tile_b, FEAT_IN), lambda i: (i, 0))
    out_spec = pl.BlockSpec((tile_b, 1), lambda i: (i, 0))

    def _resident(arr):  # constant block index -> stays in VMEM across grid
        return pl.BlockSpec(arr.shape, lambda i: (0, 0))

    args = [x]
    in_specs = [x_spec]
    for w, b in kparams:
        args.extend([w, b])
        in_specs.extend([_resident(w), _resident(b)])

    y = pl.pallas_call(
        _make_mlp_kernel(bf16_epilogue),
        out_shape=jax.ShapeDtypeStruct((B, 1), jnp.float32),
        grid=(num_tiles,),
        in_specs=in_specs,
        out_specs=out_spec,
        compiler_params=pltpu.CompilerParams(
            dimension_semantics=(
                ("parallel",) if num_tiles > 1 else ("arbitrary",))),
    )(*args)
    return y


def init_params(key):
    """PyTorch-layout params: list of (W (out,in) f32, b (out,) f32),
    nn.Linear default init U[-1/sqrt(fan_in), +1/sqrt(fan_in)]."""
    dims = [(784, 512), (512, 256), (256, 128), (128, 64), (64, 1)]
    params = []
    for i, (fan_in, fan_out) in enumerate(dims):
        kw, kb = jax.random.split(jax.random.fold_in(key, i))
        bound = 1.0 / (fan_in ** 0.5)
        w = jax.random.uniform(kw, (fan_out, fan_in), jnp.float32,
                               minval=-bound, maxval=bound)
        b = jax.random.uniform(kb, (fan_out,), jnp.float32,
                               minval=-bound, maxval=bound)
        params.append((w, b))
    return params


def prepare_kernel_params(params):
    """Kernel-side layouts:
       - fc1..fc3: W.T (in, out) bf16; b as (1, out) f32 rows.
       - fc4: W.T zero-padded (128, 64) -> (128, 128) bf16; b -> (1, 128) f32.
       - out: W as a (1, 64) row zero-padded to (1, 128) f32; b as (1, 1) f32."""
    kparams = []
    for i, (w, b) in enumerate(params):
        if i < 4:
            w_t = w.T.astype(jnp.bfloat16)                 # (in, out)
            b_row = b.reshape(1, -1).astype(jnp.float32)   # (1, out)
            if i == 3:                                     # pad N: 64 -> 128
                w_t = jnp.pad(w_t, ((0, 0), (0, HID_PAD - w_t.shape[1])))
                b_row = jnp.pad(b_row, ((0, 0), (0, HID_PAD - b_row.shape[1])))
            kparams.append((w_t, b_row))
        else:
            w_row = jnp.pad(w.reshape(1, -1).astype(jnp.float32),
                            ((0, 0), (0, HID_PAD - w.shape[1])))   # (1, 128)
            kparams.append((w_row, b.reshape(1, 1).astype(jnp.float32)))
    return kparams


def _reference_forward(x, params):
    """Pure-JAX f32 reference matching the PyTorch module."""
    h = x
    for i, (w, b) in enumerate(params):
        h = h @ w.T + b
        if i < len(params) - 1:
            h = jnp.maximum(h, 0.0)
    return jax.nn.sigmoid(h)


if __name__ == "__main__":
    key = jax.random.PRNGKey(0)
    k_x, k_x2, k_p = jax.random.split(key, 3)

    params = init_params(k_p)
    kparams = prepare_kernel_params(params)

    # Case 1: small batch (single tile, "arbitrary" grid).
    B = 8
    x = jax.random.normal(k_x, (B, FEAT_IN), dtype=jnp.float32)
    y = jax.block_until_ready(d_forward(x, kparams))
    y_ref = _reference_forward(x, params)
    assert y.shape == (B, 1)
    # bf16 matmul operands -> loosened tolerance vs. f32 reference.
    assert jnp.allclose(y, y_ref, atol=3e-2, rtol=3e-2)

    # Case 2: ragged batch, multiple tiles, uneven last tile (masked stores).
    B2 = 37
    x2 = jax.random.normal(k_x2, (B2, FEAT_IN), dtype=jnp.float32)
    y2 = jax.block_until_ready(d_forward(x2, kparams, max_tile_b=16))
    y2_ref = _reference_forward(x2, params)
    assert y2.shape == (B2, 1)
    assert jnp.allclose(y2, y2_ref, atol=3e-2, rtol=3e-2)

    print("KERNEL_OK")
</pallas_src>

<mosaic_0001>
module attributes {stable_mosaic.version = 11 : i64} {
  func.func @kernel(%arg0: i32, %arg1: memref<8x784xf32, #tpu.memory_space<vmem>>, %arg2: memref<784x512xbf16, #tpu.memory_space<vmem>>, %arg3: memref<1x512xf32, #tpu.memory_space<vmem>>, %arg4: memref<512x256xbf16, #tpu.memory_space<vmem>>, %arg5: memref<1x256xf32, #tpu.memory_space<vmem>>, %arg6: memref<256x128xbf16, #tpu.memory_space<vmem>>, %arg7: memref<1x128xf32, #tpu.memory_space<vmem>>, %arg8: memref<128x128xbf16, #tpu.memory_space<vmem>>, %arg9: memref<1x128xf32, #tpu.memory_space<vmem>>, %arg10: memref<1x128xf32, #tpu.memory_space<vmem>>, %arg11: memref<1x1xf32, #tpu.memory_space<vmem>>, %arg12: memref<8x1xf32, #tpu.memory_space<vmem>>) attributes {dimension_semantics = [#tpu.dimension_semantics<arbitrary>], iteration_bounds = array<i64: 1>, scalar_prefetch = 0 : i64, scratch_operands = 0 : i64, tpu.core_type = #tpu.core_type<tc>, window_params = [{transform_indices = @transform_0, window_bounds = array<i64: 8, 784>}, {pipeline_mode = #tpu.pipeline_mode<synchronous>, transform_indices = @transform_1, window_bounds = array<i64: 784, 512>}, {pipeline_mode = #tpu.pipeline_mode<synchronous>, transform_indices = @transform_2, window_bounds = array<i64: 1, 512>}, {pipeline_mode = #tpu.pipeline_mode<synchronous>, transform_indices = @transform_3, window_bounds = array<i64: 512, 256>}, {pipeline_mode = #tpu.pipeline_mode<synchronous>, transform_indices = @transform_4, window_bounds = array<i64: 1, 256>}, {pipeline_mode = #tpu.pipeline_mode<synchronous>, transform_indices = @transform_5, window_bounds = array<i64: 256, 128>}, {pipeline_mode = #tpu.pipeline_mode<synchronous>, transform_indices = @transform_6, window_bounds = array<i64: 1, 128>}, {pipeline_mode = #tpu.pipeline_mode<synchronous>, transform_indices = @transform_7, window_bounds = array<i64: 128, 128>}, {pipeline_mode = #tpu.pipeline_mode<synchronous>, transform_indices = @transform_8, window_bounds = array<i64: 1, 128>}, {pipeline_mode = #tpu.pipeline_mode<synchronous>, transform_indices = @transform_9, window_bounds = array<i64: 1, 128>}, {pipeline_mode = #tpu.pipeline_mode<synchronous>, transform_indices = @transform_10, window_bounds = array<i64: 1, 1>}, {transform_indices = @transform_11, window_bounds = array<i64: 8, 1>}]} {
    %c0 = arith.constant 0 : index
    %c0_0 = arith.constant 0 : index
    %0 = vector.load %arg1[%c0, %c0_0] : memref<8x784xf32, #tpu.memory_space<vmem>>, vector<8x784xf32>
    %1 = arith.truncf %0 : vector<8x784xf32> to vector<8x784xbf16>
    %c0_1 = arith.constant 0 : index
    %c0_2 = arith.constant 0 : index
    %2 = vector.load %arg2[%c0_1, %c0_2] : memref<784x512xbf16, #tpu.memory_space<vmem>>, vector<784x512xbf16>
    %cst = arith.constant dense<0.000000e+00> : vector<8x512xf32>
    %3 = tpu.matmul %1, %2, %cst {dimension_numbers = #tpu.dot_dimension_numbers<[1], [0], [0], [1], [0, 0, 1, 1], [], []>} : vector<8x784xbf16>, vector<784x512xbf16>, vector<8x512xf32> -> vector<8x512xf32>
    %c0_3 = arith.constant 0 : index
    %c0_4 = arith.constant 0 : index
    %4 = vector.load %arg3[%c0_3, %c0_4] : memref<1x512xf32, #tpu.memory_space<vmem>>, vector<1x512xf32>
    %5 = vector.broadcast %4 : vector<1x512xf32> to vector<8x512xf32>
    %6 = arith.addf %3, %5 : vector<8x512xf32>
    %cst_5 = arith.constant 0.000000e+00 : f32
    %7 = vector.broadcast %cst_5 : f32 to vector<8x512xf32>
    %8 = arith.maximumf %6, %7 : vector<8x512xf32>
    %9 = arith.truncf %8 : vector<8x512xf32> to vector<8x512xbf16>
    %c0_6 = arith.constant 0 : index
    %c0_7 = arith.constant 0 : index
    %10 = vector.load %arg4[%c0_6, %c0_7] : memref<512x256xbf16, #tpu.memory_space<vmem>>, vector<512x256xbf16>
    %cst_8 = arith.constant dense<0.000000e+00> : vector<8x256xf32>
    %11 = tpu.matmul %9, %10, %cst_8 {dimension_numbers = #tpu.dot_dimension_numbers<[1], [0], [0], [1], [0, 0, 1, 1], [], []>} : vector<8x512xbf16>, vector<512x256xbf16>, vector<8x256xf32> -> vector<8x256xf32>
    %c0_9 = arith.constant 0 : index
    %c0_10 = arith.constant 0 : index
    %12 = vector.load %arg5[%c0_9, %c0_10] : memref<1x256xf32, #tpu.memory_space<vmem>>, vector<1x256xf32>
    %13 = vector.broadcast %12 : vector<1x256xf32> to vector<8x256xf32>
    %14 = arith.addf %11, %13 : vector<8x256xf32>
    %cst_11 = arith.constant 0.000000e+00 : f32
    %15 = vector.broadcast %cst_11 : f32 to vector<8x256xf32>
    %16 = arith.maximumf %14, %15 : vector<8x256xf32>
    %17 = arith.truncf %16 : vector<8x256xf32> to vector<8x256xbf16>
    %c0_12 = arith.constant 0 : index
    %c0_13 = arith.constant 0 : index
    %18 = vector.load %arg6[%c0_12, %c0_13] : memref<256x128xbf16, #tpu.memory_space<vmem>>, vector<256x128xbf16>
    %cst_14 = arith.constant dense<0.000000e+00> : vector<8x128xf32>
    %19 = tpu.matmul %17, %18, %cst_14 {dimension_numbers = #tpu.dot_dimension_numbers<[1], [0], [0], [1], [0, 0, 1, 1], [], []>} : vector<8x256xbf16>, vector<256x128xbf16>, vector<8x128xf32> -> vector<8x128xf32>
    %c0_15 = arith.constant 0 : index
    %c0_16 = arith.constant 0 : index
    %20 = vector.load %arg7[%c0_15, %c0_16] : memref<1x128xf32, #tpu.memory_space<vmem>>, vector<1x128xf32>
    %21 = vector.broadcast %20 : vector<1x128xf32> to vector<8x128xf32>
    %22 = arith.addf %19, %21 : vector<8x128xf32>
    %cst_17 = arith.constant 0.000000e+00 : f32
    %23 = vector.broadcast %cst_17 : f32 to vector<8x128xf32>
    %24 = arith.maximumf %22, %23 : vector<8x128xf32>
    %25 = arith.truncf %24 : vector<8x128xf32> to vector<8x128xbf16>
    %c0_18 = arith.constant 0 : index
    %c0_19 = arith.constant 0 : index
    %26 = vector.load %arg8[%c0_18, %c0_19] : memref<128x128xbf16, #tpu.memory_space<vmem>>, vector<128x128xbf16>
    %cst_20 = arith.constant dense<0.000000e+00> : vector<8x128xf32>
    %27 = tpu.matmul %25, %26, %cst_20 {dimension_numbers = #tpu.dot_dimension_numbers<[1], [0], [0], [1], [0, 0, 1, 1], [], []>} : vector<8x128xbf16>, vector<128x128xbf16>, vector<8x128xf32> -> vector<8x128xf32>
    %c0_21 = arith.constant 0 : index
    %c0_22 = arith.constant 0 : index
    %28 = vector.load %arg9[%c0_21, %c0_22] : memref<1x128xf32, #tpu.memory_space<vmem>>, vector<1x128xf32>
    %29 = vector.broadcast %28 : vector<1x128xf32> to vector<8x128xf32>
    %30 = arith.addf %27, %29 : vector<8x128xf32>
    %cst_23 = arith.constant 0.000000e+00 : f32
    %31 = vector.broadcast %cst_23 : f32 to vector<8x128xf32>
    %32 = arith.maximumf %30, %31 : vector<8x128xf32>
    %33 = arith.truncf %32 : vector<8x128xf32> to vector<8x128xbf16>
    %34 = arith.extf %33 : vector<8x128xbf16> to vector<8x128xf32>
    %c0_24 = arith.constant 0 : index
    %c0_25 = arith.constant 0 : index
    %35 = vector.load %arg10[%c0_24, %c0_25] : memref<1x128xf32, #tpu.memory_space<vmem>>, vector<1x128xf32>
    %36 = vector.broadcast %35 : vector<1x128xf32> to vector<8x128xf32>
    %37 = arith.mulf %34, %36 : vector<8x128xf32>
    %cst_26 = arith.constant dense<0.000000e+00> : vector<8xf32>
    %38 = vector.multi_reduction <add>, %37, %cst_26 [1] : vector<8x128xf32> to vector<8xf32>
    %39 = vector.shape_cast %38 : vector<8xf32> to vector<8x1xf32>
    %c0_27 = arith.constant 0 : index
    %c0_28 = arith.constant 0 : index
    %40 = vector.load %arg11[%c0_27, %c0_28] : memref<1x1xf32, #tpu.memory_space<vmem>>, vector<1x1xf32>
    %41 = vector.broadcast %40 : vector<1x1xf32> to vector<8x1xf32>
    %42 = arith.addf %39, %41 : vector<8x1xf32>
    %43 = arith.negf %42 : vector<8x1xf32>
    %44 = math.exp %43 : vector<8x1xf32>
    %cst_29 = arith.constant 1.000000e+00 : f32
    %45 = vector.broadcast %cst_29 : f32 to vector<8x1xf32>
    %46 = arith.addf %45, %44 : vector<8x1xf32>
    %47 = arith.divf %45, %46 : vector<8x1xf32>
    %c0_30 = arith.constant 0 : index
    %c0_31 = arith.constant 0 : index
    %48 = vector.load %arg12[%c0_30, %c0_31] : memref<8x1xf32, #tpu.memory_space<vmem>>, vector<8x1xf32>
    tpu.vector_store %arg12[%c0_30, %c0_31], %47 {strides = array<i32>} : memref<8x1xf32, #tpu.memory_space<vmem>>, vector<8x1xf32>,
    return
  }
  func.func @transform_0(%arg0: i32) -> (i32, i32) {
    %c0_i32 = arith.constant 0 : i32
    %c0_i32_0 = arith.constant 0 : i32
    return %arg0, %c0_i32 : i32, i32
  }
  func.func @transform_1(%arg0: i32) -> (i32, i32) {
    %c0_i32 = arith.constant 0 : i32
    %c0_i32_0 = arith.constant 0 : i32
    %c0_i32_1 = arith.constant 0 : i32
    return %c0_i32, %c0_i32_0 : i32, i32
  }
  func.func @transform_2(%arg0: i32) -> (i32, i32) {
    %c0_i32 = arith.constant 0 : i32
    %c0_i32_0 = arith.constant 0 : i32
    %c0_i32_1 = arith.constant 0 : i32
    return %c0_i32, %c0_i32_0 : i32, i32
  }
  func.func @transform_3(%arg0: i32) -> (i32, i32) {
    %c0_i32 = arith.constant 0 : i32
    %c0_i32_0 = arith.constant 0 : i32
    %c0_i32_1 = arith.constant 0 : i32
    return %c0_i32, %c0_i32_0 : i32, i32
  }
  func.func @transform_4(%arg0: i32) -> (i32, i32) {
    %c0_i32 = arith.constant 0 : i32
    %c0_i32_0 = arith.constant 0 : i32
    %c0_i32_1 = arith.constant 0 : i32
    return %c0_i32, %c0_i32_0 : i32, i32
  }
  func.func @transform_5(%arg0: i32) -> (i32, i32) {
    %c0_i32 = arith.constant 0 : i32
    %c0_i32_0 = arith.constant 0 : i32
    %c0_i32_1 = arith.constant 0 : i32
    return %c0_i32, %c0_i32_0 : i32, i32
  }
  func.func @transform_6(%arg0: i32) -> (i32, i32) {
    %c0_i32 = arith.constant 0 : i32
    %c0_i32_0 = arith.constant 0 : i32
    %c0_i32_1 = arith.constant 0 : i32
    return %c0_i32, %c0_i32_0 : i32, i32
  }
  func.func @transform_7(%arg0: i32) -> (i32, i32) {
    %c0_i32 = arith.constant 0 : i32
    %c0_i32_0 = arith.constant 0 : i32
    %c0_i32_1 = arith.constant 0 : i32
    return %c0_i32, %c0_i32_0 : i32, i32
  }
  func.func @transform_8(%arg0: i32) -> (i32, i32) {
    %c0_i32 = arith.constant 0 : i32
    %c0_i32_0 = arith.constant 0 : i32
    %c0_i32_1 = arith.constant 0 : i32
    return %c0_i32, %c0_i32_0 : i32, i32
  }
  func.func @transform_9(%arg0: i32) -> (i32, i32) {
    %c0_i32 = arith.constant 0 : i32
    %c0_i32_0 = arith.constant 0 : i32
    %c0_i32_1 = arith.constant 0 : i32
    return %c0_i32, %c0_i32_0 : i32, i32
  }
  func.func @transform_10(%arg0: i32) -> (i32, i32) {
    %c0_i32 = arith.constant 0 : i32
    %c0_i32_0 = arith.constant 0 : i32
    %c0_i32_1 = arith.constant 0 : i32
    return %c0_i32, %c0_i32_0 : i32, i32
  }
  func.func @transform_11(%arg0: i32) -> (i32, i32) {
    %c0_i32 = arith.constant 0 : i32
    %c0_i32_0 = arith.constant 0 : i32
    return %arg0, %c0_i32 : i32, i32
  }
}

</mosaic_0001>

<llo_original>
// kernel: tpu_custom_call.1
$region0: #{tpu_custom_call.1}
  #allocation0 [shape = 'u32[]', space=smem, size = 0x4, offset = 0x4, fixed_abs, tag = 'smem constant byte address 0x4 - core index']
  #allocation1 [shape = 'u32[144,128]{1,0:T(1,128)}', space=vmem, size = 0x12000, scoped, tag = 'internal scratch']
  #allocation2 [shape = 'f32[1,1]{1,0:T(1,128)S(1)}', space=vmem, size = 0x200, scoped, tag = 'scoped memory for tpu_custom_call.1']
  %s0 = inlined_call_operand.hbm [shape: f32[8,784], index: 0, kind: input, shape index: {}]
  %s1 = inlined_call_operand.hbm [shape: bf16[784,512], index: 1, kind: input, shape index: {}]
  %s2 = inlined_call_operand.vmem [shape: f32[1,512], index: 2, kind: input, shape index: {}]
  %s3 = inlined_call_operand.hbm [shape: bf16[512,256], index: 3, kind: input, shape index: {}]
  %s4 = inlined_call_operand.vmem [shape: f32[1,256], index: 4, kind: input, shape index: {}]
  %s5 = inlined_call_operand.hbm [shape: bf16[256,128], index: 5, kind: input, shape index: {}]
  %s6 = inlined_call_operand.vmem [shape: f32[1,128], index: 6, kind: input, shape index: {}]
  %s7 = inlined_call_operand.hbm [shape: bf16[128,128], index: 7, kind: input, shape index: {}]
  %s8 = inlined_call_operand.vmem [shape: f32[1,128], index: 8, kind: input, shape index: {}]
  %s9 = inlined_call_operand.vmem [shape: f32[1,128], index: 9, kind: input, shape index: {}]
  %s10 = inlined_call_operand.<no memory space> [shape: f32[1,1], index: 10, kind: input, shape index: {}]
  %s11 = inlined_call_operand.vmem [shape: f32[8,1], index: 11, kind: output, shape index: {}]
  %s12 = sld [smem:[#allocation0]]
  $region74: #{tpu_custom_call.1} parent=0
    _
  %s14 = ssub.s32 1, %s12
  %s15 = scalar_select 0, %s14, %s12
  %v16 = vstv %s10
  %17 = vst [vmem:[#allocation2] sm:$0x1] %v16
  $region1: #{tpu_custom_call.1} parent=0
    #allocation3 [shape = 'u8[28672]{0}', space=vmem, size = 0x7000, scoped, tag = 'input window, operand 0, single buffered']
    #allocation4 [shape = 's32[1]{0}', space=sflag, size = 0x4, scoped, tag = 'scoped memory for tpu_custom_call.1']
    #allocation5 [shape = 'u8[802816]{0}', space=vmem, size = 0xc4000, scoped, tag = 'input window, operand 1, single buffered']
    #allocation6 [shape = 's32[1]{0}', space=sflag, size = 0x4, scoped, tag = 'scoped memory for tpu_custom_call.1']
    #allocation7 [shape = 'u8[262144]{0}', space=vmem, size = 0x40000, scoped, tag = 'input window, operand 3, single buffered']
    #allocation8 [shape = 'u8[65536]{0}', space=vmem, size = 0x10000, scoped, tag = 'input window, operand 5, single buffered']
    #allocation9 [shape = 's32[1]{0}', space=sflag, size = 0x4, scoped, tag = 'scoped memory for tpu_custom_call.1']
    #allocation10 [shape = 'u8[32768]{0}', space=vmem, size = 0x8000, scoped, tag = 'input window, operand 7, single buffered']
    %18 = vsyncpa [#allocation4], 0
    %19 = vsyncpa [#allocation6], 0
    %20 = vsyncpa [#allocation9], 0
    // Predicated region
    $region2: #{tpu_custom_call.1} parent=1 // pred_check
      _
    $region3: #{tpu_custom_call.1} parent=1 // pred_check_branch
      %22 = sbr.rel (0) target = $region5
    $region4: #{tpu_custom_call.1} parent=1 // pred_region
      %s24 = ssub.s32 896, 896
      %25 = vsyncadd [#allocation4], %s24
      %s27 = sshll.u32 [#allocation3], 4
      %s28 = int_to_ptr.vmem [resolvable:$true] %s27
      %30 = dma.hbm_to_vmem [thread:$0]  %s0, 896, %s28, [#allocation4]
    $region5: #{tpu_custom_call.1} parent=1 // pred_fallthru
      _
    // Predicated region
    $region6: #{tpu_custom_call.1} parent=1 // pred_check
      _
    $region7: #{tpu_custom_call.1} parent=1 // pred_check_branch
      %32 = sbr.rel (0) target = $region9
    $region8: #{tpu_custom_call.1} parent=1 // pred_region
      %s34 = ssub.s32 25088, 25088
      %35 = vsyncadd [#allocation6], %s34
      %s36 = sshll.u32 [#allocation5], 4
      %s37 = int_to_ptr.vmem [resolvable:$true] %s36
      %42 = dma.hbm_to_vmem [thread:$0]  %s1, 25088, %s37, [#allocation6], 256, 256, 16
    $region9: #{tpu_custom_call.1} parent=1 // pred_fallthru
      _
    // Predicated region
    $region10: #{tpu_custom_call.1} parent=1 // pred_check
      _
    $region11: #{tpu_custom_call.1} parent=1 // pred_check_branch
      %44 = sbr.rel (0) target = $region13
    $region12: #{tpu_custom_call.1} parent=1 // pred_region
      _
    $region13: #{tpu_custom_call.1} parent=1 // pred_fallthru
      _
    // Predicated region
    $region14: #{tpu_custom_call.1} parent=1 // pred_check
      _
    $region15: #{tpu_custom_call.1} parent=1 // pred_check_branch
      %46 = sbr.rel (0) target = $region17
    $region16: #{tpu_custom_call.1} parent=1 // pred_region
      %s48 = ssub.s32 8192, 8192
      %49 = vsyncadd [#allocation6], %s48
      %s50 = sshll.u32 [#allocation7], 4
      %s51 = int_to_ptr.vmem [resolvable:$true] %s50
      %56 = dma.hbm_to_vmem [thread:$0]  %s3, 8192, %s51, [#allocation6], 128, 128, 8
    $region17: #{tpu_custom_call.1} parent=1 // pred_fallthru
      _
    // Predicated region
    $region18: #{tpu_custom_call.1} parent=1 // pred_check
      _
    $region19: #{tpu_custom_call.1} parent=1 // pred_check_branch
      %58 = sbr.rel (0) target = $region21
    $region20: #{tpu_custom_call.1} parent=1 // pred_region
      _
    $region21: #{tpu_custom_call.1} parent=1 // pred_fallthru
      _
    // Predicated region
    $region22: #{tpu_custom_call.1} parent=1 // pred_check
      _
    $region23: #{tpu_custom_call.1} parent=1 // pred_check_branch
      %60 = sbr.rel (0) target = $region25
    $region24: #{tpu_custom_call.1} parent=1 // pred_region
      %s62 = ssub.s32 2048, 2048
      %63 = vsyncadd [#allocation9], %s62
      %s64 = sshll.u32 [#allocation8], 4
      %s65 = int_to_ptr.vmem [resolvable:$true] %s64
      %70 = dma.hbm_to_vmem [thread:$0]  %s5, 2048, %s65, [#allocation9], 64, 64, 4
    $region25: #{tpu_custom_call.1} parent=1 // pred_fallthru
      _
    // Predicated region
    $region26: #{tpu_custom_call.1} parent=1 // pred_check
      _
    $region27: #{tpu_custom_call.1} parent=1 // pred_check_branch
      %72 = sbr.rel (0) target = $region29
    $region28: #{tpu_custom_call.1} parent=1 // pred_region
      _
    $region29: #{tpu_custom_call.1} parent=1 // pred_fallthru
      _
    // Predicated region
    $region30: #{tpu_custom_call.1} parent=1 // pred_check
      _
    $region31: #{tpu_custom_call.1} parent=1 // pred_check_branch
      %74 = sbr.rel (0) target = $region33
    $region32: #{tpu_custom_call.1} parent=1 // pred_region
      %s76 = ssub.s32 1024, 1024
      %77 = vsyncadd [#allocation9], %s76
      %s78 = sshll.u32 [#allocation10], 4
      %s79 = int_to_ptr.vmem [resolvable:$true] %s78
      %84 = dma.hbm_to_vmem [thread:$0]  %s7, 1024, %s79, [#allocation9], 64, 64, 4
    $region33: #{tpu_custom_call.1} parent=1 // pred_fallthru
      _
    // Predicated region
    $region34: #{tpu_custom_call.1} parent=1 // pred_check
      _
    $region35: #{tpu_custom_call.1} parent=1 // pred_check_branch
      %86 = sbr.rel (0) target = $region37
    $region36: #{tpu_custom_call.1} parent=1 // pred_region
      _
    $region37: #{tpu_custom_call.1} parent=1 // pred_fallthru
      _
    // Predicated region
    $region38: #{tpu_custom_call.1} parent=1 // pred_check
      _
    $region39: #{tpu_custom_call.1} parent=1 // pred_check_branch
      %88 = sbr.rel (0) target = $region41
    $region40: #{tpu_custom_call.1} parent=1 // pred_region
      _
    $region41: #{tpu_custom_call.1} parent=1 // pred_fallthru
      _
    // Predicated region
    $region42: #{tpu_custom_call.1} parent=1 // pred_check
      _
    $region43: #{tpu_custom_call.1} parent=1 // pred_check_branch
      %90 = sbr.rel (0) target = $region45
    $region44: #{tpu_custom_call.1} parent=1 // pred_region
      _
    $region45: #{tpu_custom_call.1} parent=1 // pred_fallthru
      _
    // Predicated region
    $region46: #{tpu_custom_call.1} parent=1 // pred_check
      _
    $region47: #{tpu_custom_call.1} parent=1 // pred_check_branch
      %92 = sbr.rel (0) target = $region49
    $region48: #{tpu_custom_call.1} parent=1 // pred_region
      %93 = dma.done [#allocation4], 896
    $region49: #{tpu_custom_call.1} parent=1 // pred_fallthru
      _
    // Predicated region
    $region50: #{tpu_custom_call.1} parent=1 // pred_check
      _
    $region51: #{tpu_custom_call.1} parent=1 // pred_check_branch
      %95 = sbr.rel (0) target = $region53
    $region52: #{tpu_custom_call.1} parent=1 // pred_region
      %96 = dma.done [#allocation6], 25088
    $region53: #{tpu_custom_call.1} parent=1 // pred_fallthru
      _
    // Predicated region
    $region54: #{tpu_custom_call.1} parent=1 // pred_check
      _
    $region55: #{tpu_custom_call.1} parent=1 // pred_check_branch
      %98 = sbr.rel (0) target = $region57
    $region56: #{tpu_custom_call.1} parent=1 // pred_region
      %99 = dma.done [#allocation6], 8192
    $region57: #{tpu_custom_call.1} parent=1 // pred_fallthru
      _
    // Predicated region
    $region58: #{tpu_custom_call.1} parent=1 // pred_check
      _
    $region59: #{tpu_custom_call.1} parent=1 // pred_check_branch
      %101 = sbr.rel (0) target = $region61
    $region60: #{tpu_custom_call.1} parent=1 // pred_region
      %102 = dma.done [#allocation9], 2048
    $region61: #{tpu_custom_call.1} parent=1 // pred_fallthru
      _
    // Predicated region
    $region62: #{tpu_custom_call.1} parent=1 // pred_check
      _
    $region63: #{tpu_custom_call.1} parent=1 // pred_check_branch
      %104 = sbr.rel (0) target = $region65
    $region64: #{tpu_custom_call.1} parent=1 // pred_region
      %105 = dma.done [#allocation9], 1024
    $region65: #{tpu_custom_call.1} parent=1 // pred_fallthru
      _
    %v107 = vld [vmem:[#allocation3] sm:$0xff]
    %v108 = vld [vmem:[#allocation3 + $0x8] sm:$0xff]
    %v109 = vld [vmem:[#allocation3 + $0x10] sm:$0xff]
    %v110 = vld [vmem:[#allocation3 + $0x18] sm:$0xff]
    %v111 = vld [vmem:[#allocation3 + $0x20] sm:$0xff]
    %v112 = vld [vmem:[#allocation3 + $0x28] sm:$0xff]
    %v113 = vld [vmem:[#allocation3 + $0x30] sm:$0xff]
    %v114 = vpack.c.bf16 %v107, %v107
    %v115 = vpack.c.bf16 %v108, %v108
    %v116 = vpack.c.bf16 %v109, %v109
    %v117 = vpack.c.bf16 %v110, %v110
    %v118 = vpack.c.bf16 %v111, %v111
    %v119 = vpack.c.bf16 %v112, %v112
    %v120 = vpack.c.bf16 %v113, %v113
    %v121 = vld [vmem:[#allocation5] sm:$0xff]
    %v122 = vld [vmem:[#allocation5 + $0x8] sm:$0xff]
    %v123 = vld [vmem:[#allocation5 + $0x10] sm:$0xff]
    %v124 = vld [vmem:[#allocation5 + $0x18] sm:$0xff]
    %v125 = vld [vmem:[#allocation5 + $0x20] sm:$0xff]
    %v126 = vld [vmem:[#allocation5 + $0x28] sm:$0xff]
    %v127 = vld [vmem:[#allocation5 + $0x30] sm:$0xff]
    %v128 = vld [vmem:[#allocation5 + $0x38] sm:$0xff]
    %v129 = vld [vmem:[#allocation5 + $0x40] sm:$0xff]
    %v130 = vld [vmem:[#allocation5 + $0x48] sm:$0xff]
    %v131 = vld [vmem:[#allocation5 + $0x50] sm:$0xff]
    %v132 = vld [vmem:[#allocation5 + $0x58] sm:$0xff]
    %v133 = vld [vmem:[#allocation5 + $0x60] sm:$0xff]
    %v134 = vld [vmem:[#allocation5 + $0x68] sm:$0xff]
    %v135 = vld [vmem:[#allocation5 + $0x70] sm:$0xff]
    %v136 = vld [vmem:[#allocation5 + $0x78] sm:$0xff]
    %v137 = vld [vmem:[#allocation5 + $0x80] sm:$0xff]
    %v138 = vld [vmem:[#allocation5 + $0x88] sm:$0xff]
    %v139 = vld [vmem:[#allocation5 + $0x90] sm:$0xff]
    %v140 = vld [vmem:[#allocation5 + $0x98] sm:$0xff]
    %v141 = vld [vmem:[#allocation5 + $0xa0] sm:$0xff]
    %v142 = vld [vmem:[#allocation5 + $0xa8] sm:$0xff]
    %v143 = vld [vmem:[#allocation5 + $0xb0] sm:$0xff]
    %v144 = vld [vmem:[#allocation5 + $0xb8] sm:$0xff]
    %v145 = vld [vmem:[#allocation5 + $0xc0] sm:$0xff]
    %v146 = vld [vmem:[#allocation5 + $0xc8] sm:$0xff]
    %v147 = vld [vmem:[#allocation5 + $0xd0] sm:$0xff]
    %v148 = vld [vmem:[#allocation5 + $0xd8] sm:$0xff]
    %v149 = vld [vmem:[#allocation5 + $0xe0] sm:$0xff]
    %v150 = vld [vmem:[#allocation5 + $0xe8] sm:$0xff]
    %v151 = vld [vmem:[#allocation5 + $0xf0] sm:$0xff]
    %v152 = vld [vmem:[#allocation5 + $0xf8] sm:$0xff]
    %v153 = vld [vmem:[#allocation5 + $0x100] sm:$0xff]
    %v154 = vld [vmem:[#allocation5 + $0x108] sm:$0xff]
    %v155 = vld [vmem:[#allocation5 + $0x110] sm:$0xff]
    %v156 = vld [vmem:[#allocation5 + $0x118] sm:$0xff]
    %v157 = vld [vmem:[#allocation5 + $0x120] sm:$0xff]
    %v158 = vld [vmem:[#allocation5 + $0x128] sm:$0xff]
    %v159 = vld [vmem:[#allocation5 + $0x130] sm:$0xff]
    %v160 = vld [vmem:[#allocation5 + $0x138] sm:$0xff]
    %v161 = vld [vmem:[#allocation5 + $0x140] sm:$0xff]
    %v162 = vld [vmem:[#allocation5 + $0x148] sm:$0xff]
    %v163 = vld [vmem:[#allocation5 + $0x150] sm:$0xff]
    %v164 = vld [vmem:[#allocation5 + $0x158] sm:$0xff]
    %v165 = vld [vmem:[#allocation5 + $0x160] sm:$0xff]
    %v166 = vld [vmem:[#allocation5 + $0x168] sm:$0xff]
    %v167 = vld [vmem:[#allocation5 + $0x170] sm:$0xff]
    %v168 = vld [vmem:[#allocation5 + $0x178] sm:$0xff]
    %v169 = vld [vmem:[#allocation5 + $0x180] sm:$0xff]
    %v170 = vld [vmem:[#allocation5 + $0x188] sm:$0xff]
    %v171 = vld [vmem:[#allocation5 + $0x190] sm:$0xff]
    %v172 = vld [vmem:[#allocation5 + $0x198] sm:$0xff]
    %v173 = vld [vmem:[#allocation5 + $0x1a0] sm:$0xff]
    %v174 = vld [vmem:[#allocation5 + $0x1a8] sm:$0xff]
    %v175 = vld [vmem:[#allocation5 + $0x1b0] sm:$0xff]
    %v176 = vld [vmem:[#allocation5 + $0x1b8] sm:$0xff]
    %v177 = vld [vmem:[#allocation5 + $0x1c0] sm:$0xff]
    %v178 = vld [vmem:[#allocation5 + $0x1c8] sm:$0xff]
    %v179 = vld [vmem:[#allocation5 + $0x1d0] sm:$0xff]
    %v180 = vld [vmem:[#allocation5 + $0x1d8] sm:$0xff]
    %v181 = vld [vmem:[#allocation5 + $0x1e0] sm:$0xff]
    %v182 = vld [vmem:[#allocation5 + $0x1e8] sm:$0xff]
    %v183 = vld [vmem:[#allocation5 + $0x1f0] sm:$0xff]
    %v184 = vld [vmem:[#allocation5 + $0x1f8] sm:$0xff]
    %v185 = vld [vmem:[#allocation5 + $0x200] sm:$0xff]
    %v186 = vld [vmem:[#allocation5 + $0x208] sm:$0xff]
    %v187 = vld [vmem:[#allocation5 + $0x210] sm:$0xff]
    %v188 = vld [vmem:[#allocation5 + $0x218] sm:$0xff]
    %v189 = vld [vmem:[#allocation5 + $0x220] sm:$0xff]
    %v190 = vld [vmem:[#allocation5 + $0x228] sm:$0xff]
    %v191 = vld [vmem:[#allocation5 + $0x230] sm:$0xff]
    %v192 = vld [vmem:[#allocation5 + $0x238] sm:$0xff]
    %v193 = vld [vmem:[#allocation5 + $0x240] sm:$0xff]
    %v194 = vld [vmem:[#allocation5 + $0x248] sm:$0xff]
    %v195 = vld [vmem:[#allocation5 + $0x250] sm:$0xff]
    %v196 = vld [vmem:[#allocation5 + $0x258] sm:$0xff]
    %v197 = vld [vmem:[#allocation5 + $0x260] sm:$0xff]
    %v198 = vld [vmem:[#allocation5 + $0x268] sm:$0xff]
    %v199 = vld [vmem:[#allocation5 + $0x270] sm:$0xff]
    %v200 = vld [vmem:[#allocation5 + $0x278] sm:$0xff]
    %v201 = vld [vmem:[#allocation5 + $0x280] sm:$0xff]
    %v202 = vld [vmem:[#allocation5 + $0x288] sm:$0xff]
    %v203 = vld [vmem:[#allocation5 + $0x290] sm:$0xff]
    %v204 = vld [vmem:[#allocation5 + $0x298] sm:$0xff]
    %v205 = vld [vmem:[#allocation5 + $0x2a0] sm:$0xff]
    %v206 = vld [vmem:[#allocation5 + $0x2a8] sm:$0xff]
    %v207 = vld [vmem:[#allocation5 + $0x2b0] sm:$0xff]
    %v208 = vld [vmem:[#allocation5 + $0x2b8] sm:$0xff]
    %v209 = vld [vmem:[#allocation5 + $0x2c0] sm:$0xff]
    %v210 = vld [vmem:[#allocation5 + $0x2c8] sm:$0xff]
    %v211 = vld [vmem:[#allocation5 + $0x2d0] sm:$0xff]
    %v212 = vld [vmem:[#allocation5 + $0x2d8] sm:$0xff]
    %v213 = vld [vmem:[#allocation5 + $0x2e0] sm:$0xff]
    %v214 = vld [vmem:[#allocation5 + $0x2e8] sm:$0xff]
    %v215 = vld [vmem:[#allocation5 + $0x2f0] sm:$0xff]
    %v216 = vld [vmem:[#allocation5 + $0x2f8] sm:$0xff]
    %v217 = vld [vmem:[#allocation5 + $0x300] sm:$0xff]
    %v218 = vld [vmem:[#allocation5 + $0x308] sm:$0xff]
    %v219 = vld [vmem:[#allocation5 + $0x310] sm:$0xff]
    %v220 = vld [vmem:[#allocation5 + $0x318] sm:$0xff]
    %v221 = vld [vmem:[#allocation5 + $0x320] sm:$0xff]
    %v222 = vld [vmem:[#allocation5 + $0x328] sm:$0xff]
    %v223 = vld [vmem:[#allocation5 + $0x330] sm:$0xff]
    %v224 = vld [vmem:[#allocation5 + $0x338] sm:$0xff]
    %v225 = vld [vmem:[#allocation5 + $0x340] sm:$0xff]
    %v226 = vld [vmem:[#allocation5 + $0x348] sm:$0xff]
    %v227 = vld [vmem:[#allocation5 + $0x350] sm:$0xff]
    %v228 = vld [vmem:[#allocation5 + $0x358] sm:$0xff]
    %v229 = vld [vmem:[#allocation5 + $0x360] sm:$0xff]
    %v230 = vld [vmem:[#allocation5 + $0x368] sm:$0xff]
    %v231 = vld [vmem:[#allocation5 + $0x370] sm:$0xff]
    %v232 = vld [vmem:[#allocation5 + $0x378] sm:$0xff]
    %v233 = vld [vmem:[#allocation5 + $0x380] sm:$0xff]
    %v234 = vld [vmem:[#allocation5 + $0x388] sm:$0xff]
    %v235 = vld [vmem:[#allocation5 + $0x390] sm:$0xff]
    %v236 = vld [vmem:[#allocation5 + $0x398] sm:$0xff]
    %v237 = vld [vmem:[#allocation5 + $0x3a0] sm:$0xff]
    %v238 = vld [vmem:[#allocation5 + $0x3a8] sm:$0xff]
    %v239 = vld [vmem:[#allocation5 + $0x3b0] sm:$0xff]
    %v240 = vld [vmem:[#allocation5 + $0x3b8] sm:$0xff]
    %v241 = vld [vmem:[#allocation5 + $0x3c0] sm:$0xff]
    %v242 = vld [vmem:[#allocation5 + $0x3c8] sm:$0xff]
    %v243 = vld [vmem:[#allocation5 + $0x3d0] sm:$0xff]
    %v244 = vld [vmem:[#allocation5 + $0x3d8] sm:$0xff]
    %v245 = vld [vmem:[#allocation5 + $0x3e0] sm:$0xff]
    %v246 = vld [vmem:[#allocation5 + $0x3e8] sm:$0xff]
    %v247 = vld [vmem:[#allocation5 + $0x3f0] sm:$0xff]
    %v248 = vld [vmem:[#allocation5 + $0x3f8] sm:$0xff]
    %v249 = vld [vmem:[#allocation5 + $0x400] sm:$0xff]
    %v250 = vld [vmem:[#allocation5 + $0x408] sm:$0xff]
    %v251 = vld [vmem:[#allocation5 + $0x410] sm:$0xff]
    %v252 = vld [vmem:[#allocation5 + $0x418] sm:$0xff]
    %v253 = vld [vmem:[#allocation5 + $0x420] sm:$0xff]
    %v254 = vld [vmem:[#allocation5 + $0x428] sm:$0xff]
    %v255 = vld [vmem:[#allocation5 + $0x430] sm:$0xff]
    %v256 = vld [vmem:[#allocation5 + $0x438] sm:$0xff]
    %v257 = vld [vmem:[#allocation5 + $0x440] sm:$0xff]
    %v258 = vld [vmem:[#allocation5 + $0x448] sm:$0xff]
    %v259 = vld [vmem:[#allocation5 + $0x450] sm:$0xff]
    %v260 = vld [vmem:[#allocation5 + $0x458] sm:$0xff]
    %v261 = vld [vmem:[#allocation5 + $0x460] sm:$0xff]
    %v262 = vld [vmem:[#allocation5 + $0x468] sm:$0xff]
    %v263 = vld [vmem:[#allocation5 + $0x470] sm:$0xff]
    %v264 = vld [vmem:[#allocation5 + $0x478] sm:$0xff]
    %v265 = vld [vmem:[#allocation5 + $0x480] sm:$0xff]
    %v266 = vld [vmem:[#allocation5 + $0x488] sm:$0xff]
    %v267 = vld [vmem:[#allocation5 + $0x490] sm:$0xff]
    %v268 = vld [vmem:[#allocation5 + $0x498] sm:$0xff]
    %v269 = vld [vmem:[#allocation5 + $0x4a0] sm:$0xff]
    %v270 = vld [vmem:[#allocation5 + $0x4a8] sm:$0xff]
    %v271 = vld [vmem:[#allocation5 + $0x4b0] sm:$0xff]
    %v272 = vld [vmem:[#allocation5 + $0x4b8] sm:$0xff]
    %v273 = vld [vmem:[#allocation5 + $0x4c0] sm:$0xff]
    %v274 = vld [vmem:[#allocation5 + $0x4c8] sm:$0xff]
    %v275 = vld [vmem:[#allocation5 + $0x4d0] sm:$0xff]
    %v276 = vld [vmem:[#allocation5 + $0x4d8] sm:$0xff]
    %v277 = vld [vmem:[#allocation5 + $0x4e0] sm:$0xff]
    %v278 = vld [vmem:[#allocation5 + $0x4e8] sm:$0xff]
    %v279 = vld [vmem:[#allocation5 + $0x4f0] sm:$0xff]
    %v280 = vld [vmem:[#allocation5 + $0x4f8] sm:$0xff]
    %v281 = vld [vmem:[#allocation5 + $0x500] sm:$0xff]
    %v282 = vld [vmem:[#allocation5 + $0x508] sm:$0xff]
    %v283 = vld [vmem:[#allocation5 + $0x510] sm:$0xff]
    %v284 = vld [vmem:[#allocation5 + $0x518] sm:$0xff]
    %v285 = vld [vmem:[#allocation5 + $0x520] sm:$0xff]
    %v286 = vld [vmem:[#allocation5 + $0x528] sm:$0xff]
    %v287 = vld [vmem:[#allocation5 + $0x530] sm:$0xff]
    %v288 = vld [vmem:[#allocation5 + $0x538] sm:$0xff]
    %v289 = vld [vmem:[#allocation5 + $0x540] sm:$0xff]
    %v290 = vld [vmem:[#allocation5 + $0x548] sm:$0xff]
    %v291 = vld [vmem:[#allocation5 + $0x550] sm:$0xff]
    %v292 = vld [vmem:[#allocation5 + $0x558] sm:$0xff]
    %v293 = vld [vmem:[#allocation5 + $0x560] sm:$0xff]
    %v294 = vld [vmem:[#allocation5 + $0x568] sm:$0xff]
    %v295 = vld [vmem:[#allocation5 + $0x570] sm:$0xff]
    %v296 = vld [vmem:[#allocation5 + $0x578] sm:$0xff]
    %v297 = vld [vmem:[#allocation5 + $0x580] sm:$0xff]
    %v298 = vld [vmem:[#allocation5 + $0x588] sm:$0xff]
    %v299 = vld [vmem:[#allocation5 + $0x590] sm:$0xff]
    %v300 = vld [vmem:[#allocation5 + $0x598] sm:$0xff]
    %v301 = vld [vmem:[#allocation5 + $0x5a0] sm:$0xff]
    %v302 = vld [vmem:[#allocation5 + $0x5a8] sm:$0xff]
    %v303 = vld [vmem:[#allocation5 + $0x5b0] sm:$0xff]
    %v304 = vld [vmem:[#allocation5 + $0x5b8] sm:$0xff]
    %v305 = vld [vmem:[#allocation5 + $0x5c0] sm:$0xff]
    %v306 = vld [vmem:[#allocation5 + $0x5c8] sm:$0xff]
    %v307 = vld [vmem:[#allocation5 + $0x5d0] sm:$0xff]
    %v308 = vld [vmem:[#allocation5 + $0x5d8] sm:$0xff]
    %v309 = vld [vmem:[#allocation5 + $0x5e0] sm:$0xff]
    %v310 = vld [vmem:[#allocation5 + $0x5e8] sm:$0xff]
    %v311 = vld [vmem:[#allocation5 + $0x5f0] sm:$0xff]
    %v312 = vld [vmem:[#allocation5 + $0x5f8] sm:$0xff]
    %v313 = vld [vmem:[#allocation5 + $0x600] sm:$0xff]
    %v314 = vld [vmem:[#allocation5 + $0x608] sm:$0xff]
    %v315 = vld [vmem:[#allocation5 + $0x610] sm:$0xff]
    %v316 = vld [vmem:[#allocation5 + $0x618] sm:$0xff]
    %v317 = vld [vmem:[%s2] sm:$0xf]
    %v319 = vlaneseq
    %v320 = vshrl.u32 %v319, 7
    %v321 = vsub.s32 0, %v320
    %v322 = vrot.slane %v317, %v321
    %v323 = vlaneseq
    %v324 = vshrl.u32 %v323, 7
    %v325 = vsub.s32 1, %v324
    %v326 = vrot.slane %v317, %v325
    %v327 = vlaneseq
    %v328 = vshrl.u32 %v327, 7
    %v329 = vsub.s32 2, %v328
    %v330 = vrot.slane %v317, %v329
    %v331 = vlaneseq
    %v332 = vshrl.u32 %v331, 7
    %v333 = vsub.s32 3, %v332
    %v334 = vrot.slane %v317, %v333
    %v535 = vunpack.c.l.b16 %v121
    %v536 = vunpack.c.h.b16 %v121
    %v537 = vunpack.c.l.b16 %v122
    %v538 = vunpack.c.h.b16 %v122
    %v539 = vunpack.c.l.b16 %v123
    %v540 = vunpack.c.h.b16 %v123
    %v541 = vunpack.c.l.b16 %v124
    %v542 = vunpack.c.h.b16 %v124
    %v543 = vunpack.c.l.b16 %v125
    %v544 = vunpack.c.h.b16 %v125
    %v545 = vunpack.c.l.b16 %v126
    %v546 = vunpack.c.h.b16 %v126
    %v547 = vunpack.c.l.b16 %v127
    %v548 = vunpack.c.h.b16 %v127
    %v549 = vunpack.c.l.b16 %v128
    %v550 = vunpack.c.h.b16 %v128
    %v551 = vunpack.c.l.b16 %v129
    %v552 = vunpack.c.h.b16 %v129
    %v553 = vunpack.c.l.b16 %v130
    %v554 = vunpack.c.h.b16 %v130
    %v555 = vunpack.c.l.b16 %v131
    %v556 = vunpack.c.h.b16 %v131
    %v557 = vunpack.c.l.b16 %v132
    %v558 = vunpack.c.h.b16 %v132
    %v559 = vunpack.c.l.b16 %v133
    %v560 = vunpack.c.h.b16 %v133
    %v561 = vunpack.c.l.b16 %v134
    %v562 = vunpack.c.h.b16 %v134
    %v563 = vunpack.c.l.b16 %v135
    %v564 = vunpack.c.h.b16 %v135
    %v565 = vunpack.c.l.b16 %v136
    %v566 = vunpack.c.h.b16 %v136
    %v567 = vunpack.c.l.b16 %v137
    %v568 = vunpack.c.h.b16 %v137
    %v569 = vunpack.c.l.b16 %v138
    %v570 = vunpack.c.h.b16 %v138
    %v571 = vunpack.c.l.b16 %v139
    %v572 = vunpack.c.h.b16 %v139
    %v573 = vunpack.c.l.b16 %v140
    %v574 = vunpack.c.h.b16 %v140
    %v575 = vunpack.c.l.b16 %v141
    %v576 = vunpack.c.h.b16 %v141
    %v577 = vunpack.c.l.b16 %v142
    %v578 = vunpack.c.h.b16 %v142
    %v579 = vunpack.c.l.b16 %v143
    %v580 = vunpack.c.h.b16 %v143
    %v581 = vunpack.c.l.b16 %v144
    %v582 = vunpack.c.h.b16 %v144
    %v583 = vunpack.c.l.b16 %v145
    %v584 = vunpack.c.h.b16 %v145
    %v585 = vunpack.c.l.b16 %v146
    %v586 = vunpack.c.h.b16 %v146
    %v587 = vunpack.c.l.b16 %v147
    %v588 = vunpack.c.h.b16 %v147
    %v589 = vunpack.c.l.b16 %v148
    %v590 = vunpack.c.h.b16 %v148
    %v591 = vunpack.c.l.b16 %v149
    %v592 = vunpack.c.h.b16 %v149
    %v593 = vunpack.c.l.b16 %v150
    %v594 = vunpack.c.h.b16 %v150
    %v595 = vunpack.c.l.b16 %v151
    %v596 = vunpack.c.h.b16 %v151
    %v597 = vunpack.c.l.b16 %v152
    %v598 = vunpack.c.h.b16 %v152
    %v599 = vunpack.c.l.b16 %v153
    %v600 = vunpack.c.h.b16 %v153
    %v601 = vunpack.c.l.b16 %v154
    %v602 = vunpack.c.h.b16 %v154
    %v603 = vunpack.c.l.b16 %v155
    %v604 = vunpack.c.h.b16 %v155
    %v605 = vunpack.c.l.b16 %v156
    %v606 = vunpack.c.h.b16 %v156
    %v607 = vunpack.c.l.b16 %v157
    %v608 = vunpack.c.h.b16 %v157
    %v609 = vunpack.c.l.b16 %v158
    %v610 = vunpack.c.h.b16 %v158
    %v611 = vunpack.c.l.b16 %v159
    %v612 = vunpack.c.h.b16 %v159
    %v613 = vunpack.c.l.b16 %v160
    %v614 = vunpack.c.h.b16 %v160
    %v615 = vunpack.c.l.b16 %v161
    %v616 = vunpack.c.h.b16 %v161
    %v617 = vunpack.c.l.b16 %v162
    %v618 = vunpack.c.h.b16 %v162
    %v619 = vunpack.c.l.b16 %v163
    %v620 = vunpack.c.h.b16 %v163
    %v621 = vunpack.c.l.b16 %v164
    %v622 = vunpack.c.h.b16 %v164
    %v623 = vunpack.c.l.b16 %v165
    %v624 = vunpack.c.h.b16 %v165
    %v625 = vunpack.c.l.b16 %v166
    %v626 = vunpack.c.h.b16 %v166
    %v627 = vunpack.c.l.b16 %v167
    %v628 = vunpack.c.h.b16 %v167
    %v629 = vunpack.c.l.b16 %v168
    %v630 = vunpack.c.h.b16 %v168
    %v631 = vunpack.c.l.b16 %v169
    %v632 = vunpack.c.h.b16 %v169
    %v633 = vunpack.c.l.b16 %v170
    %v634 = vunpack.c.h.b16 %v170
    %v635 = vunpack.c.l.b16 %v171
    %v636 = vunpack.c.h.b16 %v171
    %v637 = vunpack.c.l.b16 %v172
    %v638 = vunpack.c.h.b16 %v172
    %v639 = vunpack.c.l.b16 %v173
    %v640 = vunpack.c.h.b16 %v173
    %v641 = vunpack.c.l.b16 %v174
    %v642 = vunpack.c.h.b16 %v174
    %v643 = vunpack.c.l.b16 %v175
    %v644 = vunpack.c.h.b16 %v175
    %v645 = vunpack.c.l.b16 %v176
    %v646 = vunpack.c.h.b16 %v176
    %v647 = vunpack.c.l.b16 %v177
    %v648 = vunpack.c.h.b16 %v177
    %v649 = vunpack.c.l.b16 %v178
    %v650 = vunpack.c.h.b16 %v178
    %v651 = vunpack.c.l.b16 %v179
    %v652 = vunpack.c.h.b16 %v179
    %v653 = vunpack.c.l.b16 %v180
    %v654 = vunpack.c.h.b16 %v180
    %v655 = vunpack.c.l.b16 %v181
    %v656 = vunpack.c.h.b16 %v181
    %v657 = vunpack.c.l.b16 %v182
    %v658 = vunpack.c.h.b16 %v182
    %v659 = vunpack.c.l.b16 %v183
    %v660 = vunpack.c.h.b16 %v183
    %v661 = vunpack.c.l.b16 %v184
    %v662 = vunpack.c.h.b16 %v184
    %v663 = vunpack.c.l.b16 %v185
    %v664 = vunpack.c.h.b16 %v185
    %v665 = vunpack.c.l.b16 %v186
    %v666 = vunpack.c.h.b16 %v186
    %v667 = vunpack.c.l.b16 %v187
    %v668 = vunpack.c.h.b16 %v187
    %v669 = vunpack.c.l.b16 %v188
    %v670 = vunpack.c.h.b16 %v188
    %v671 = vunpack.c.l.b16 %v189
    %v672 = vunpack.c.h.b16 %v189
    %v673 = vunpack.c.l.b16 %v190
    %v674 = vunpack.c.h.b16 %v190
    %v675 = vunpack.c.l.b16 %v191
    %v676 = vunpack.c.h.b16 %v191
    %v677 = vunpack.c.l.b16 %v192
    %v678 = vunpack.c.h.b16 %v192
    %v679 = vunpack.c.l.b16 %v193
    %v680 = vunpack.c.h.b16 %v193
    %v681 = vunpack.c.l.b16 %v194
    %v682 = vunpack.c.h.b16 %v194
    %v683 = vunpack.c.l.b16 %v195
    %v684 = vunpack.c.h.b16 %v195
    %v685 = vunpack.c.l.b16 %v196
    %v686 = vunpack.c.h.b16 %v196
    %v687 = vunpack.c.l.b16 %v197
    %v688 = vunpack.c.h.b16 %v197
    %v689 = vunpack.c.l.b16 %v198
    %v690 = vunpack.c.h.b16 %v198
    %v691 = vunpack.c.l.b16 %v199
    %v692 = vunpack.c.h.b16 %v199
    %v693 = vunpack.c.l.b16 %v200
    %v694 = vunpack.c.h.b16 %v200
    %v695 = vunpack.c.l.b16 %v201
    %v696 = vunpack.c.h.b16 %v201
    %v697 = vunpack.c.l.b16 %v202
    %v698 = vunpack.c.h.b16 %v202
    %v699 = vunpack.c.l.b16 %v203
    %v700 = vunpack.c.h.b16 %v203
    %v701 = vunpack.c.l.b16 %v204
    %v702 = vunpack.c.h.b16 %v204
    %v703 = vunpack.c.l.b16 %v205
    %v704 = vunpack.c.h.b16 %v205
    %v705 = vunpack.c.l.b16 %v206
    %v706 = vunpack.c.h.b16 %v206
    %v707 = vunpack.c.l.b16 %v207
    %v708 = vunpack.c.h.b16 %v207
    %v709 = vunpack.c.l.b16 %v208
    %v710 = vunpack.c.h.b16 %v208
    %v711 = vunpack.c.l.b16 %v209
    %v712 = vunpack.c.h.b16 %v209
    %v713 = vunpack.c.l.b16 %v210
    %v714 = vunpack.c.h.b16 %v210
    %v715 = vunpack.c.l.b16 %v211
    %v716 = vunpack.c.h.b16 %v211
    %v717 = vunpack.c.l.b16 %v212
    %v718 = vunpack.c.h.b16 %v212
    %v719 = vunpack.c.l.b16 %v213
    %v720 = vunpack.c.h.b16 %v213
    %v721 = vunpack.c.l.b16 %v214
    %v722 = vunpack.c.h.b16 %v214
    %v723 = vunpack.c.l.b16 %v215
    %v724 = vunpack.c.h.b16 %v215
    %v725 = vunpack.c.l.b16 %v216
    %v726 = vunpack.c.h.b16 %v216
    %v727 = vunpack.c.l.b16 %v217
    %v728 = vunpack.c.h.b16 %v217
    %v729 = vunpack.c.l.b16 %v218
    %v730 = vunpack.c.h.b16 %v218
    %v731 = vunpack.c.l.b16 %v219
    %v732 = vunpack.c.h.b16 %v219
    %v733 = vunpack.c.l.b16 %v220
    %v734 = vunpack.c.h.b16 %v220
    %v735 = vunpack.c.l.b16 %v221
    %v736 = vunpack.c.h.b16 %v221
    %v737 = vunpack.c.l.b16 %v222
    %v738 = vunpack.c.h.b16 %v222
    %v739 = vunpack.c.l.b16 %v223
    %v740 = vunpack.c.h.b16 %v223
    %v741 = vunpack.c.l.b16 %v224
    %v742 = vunpack.c.h.b16 %v224
    %v743 = vunpack.c.l.b16 %v225
    %v744 = vunpack.c.h.b16 %v225
    %v745 = vunpack.c.l.b16 %v226
    %v746 = vunpack.c.h.b16 %v226
    %v747 = vunpack.c.l.b16 %v227
    %v748 = vunpack.c.h.b16 %v227
    %v749 = vunpack.c.l.b16 %v228
    %v750 = vunpack.c.h.b16 %v228
    %v751 = vunpack.c.l.b16 %v229
    %v752 = vunpack.c.h.b16 %v229
    %v753 = vunpack.c.l.b16 %v230
    %v754 = vunpack.c.h.b16 %v230
    %v755 = vunpack.c.l.b16 %v231
    %v756 = vunpack.c.h.b16 %v231
    %v757 = vunpack.c.l.b16 %v232
    %v758 = vunpack.c.h.b16 %v232
    %v759 = vunpack.c.l.b16 %v233
    %v760 = vunpack.c.h.b16 %v233
    %v761 = vunpack.c.l.b16 %v234
    %v762 = vunpack.c.h.b16 %v234
    %v763 = vunpack.c.l.b16 %v235
    %v764 = vunpack.c.h.b16 %v235
    %v765 = vunpack.c.l.b16 %v236
    %v766 = vunpack.c.h.b16 %v236
    %v767 = vunpack.c.l.b16 %v237
    %v768 = vunpack.c.h.b16 %v237
    %v769 = vunpack.c.l.b16 %v238
    %v770 = vunpack.c.h.b16 %v238
    %v771 = vunpack.c.l.b16 %v239
    %v772 = vunpack.c.h.b16 %v239
    %v773 = vunpack.c.l.b16 %v240
    %v774 = vunpack.c.h.b16 %v240
    %v775 = vunpack.c.l.b16 %v241
    %v776 = vunpack.c.h.b16 %v241
    %v777 = vunpack.c.l.b16 %v242
    %v778 = vunpack.c.h.b16 %v242
    %v779 = vunpack.c.l.b16 %v243
    %v780 = vunpack.c.h.b16 %v243
    %v781 = vunpack.c.l.b16 %v244
    %v782 = vunpack.c.h.b16 %v244
    %v783 = vunpack.c.l.b16 %v245
    %v784 = vunpack.c.h.b16 %v245
    %v785 = vunpack.c.l.b16 %v246
    %v786 = vunpack.c.h.b16 %v246
    %v787 = vunpack.c.l.b16 %v247
    %v788 = vunpack.c.h.b16 %v247
    %v789 = vunpack.c.l.b16 %v248
    %v790 = vunpack.c.h.b16 %v248
    %v791 = vunpack.c.l.b16 %v249
    %v792 = vunpack.c.h.b16 %v249
    %v793 = vunpack.c.l.b16 %v250
    %v794 = vunpack.c.h.b16 %v250
    %v795 = vunpack.c.l.b16 %v251
    %v796 = vunpack.c.h.b16 %v251
    %v797 = vunpack.c.l.b16 %v252
    %v798 = vunpack.c.h.b16 %v252
    %v799 = vunpack.c.l.b16 %v253
    %v800 = vunpack.c.h.b16 %v253
    %v801 = vunpack.c.l.b16 %v254
    %v802 = vunpack.c.h.b16 %v254
    %v803 = vunpack.c.l.b16 %v255
    %v804 = vunpack.c.h.b16 %v255
    %v805 = vunpack.c.l.b16 %v256
    %v806 = vunpack.c.h.b16 %v256
    %v807 = vunpack.c.l.b16 %v257
    %v808 = vunpack.c.h.b16 %v257
    %v809 = vunpack.c.l.b16 %v258
    %v810 = vunpack.c.h.b16 %v258
    %v811 = vunpack.c.l.b16 %v259
    %v812 = vunpack.c.h.b16 %v259
    %v813 = vunpack.c.l.b16 %v260
    %v814 = vunpack.c.h.b16 %v260
    %v815 = vunpack.c.l.b16 %v261
    %v816 = vunpack.c.h.b16 %v261
    %v817 = vunpack.c.l.b16 %v262
    %v818 = vunpack.c.h.b16 %v262
    %v819 = vunpack.c.l.b16 %v263
    %v820 = vunpack.c.h.b16 %v263
    %v821 = vunpack.c.l.b16 %v264
    %v822 = vunpack.c.h.b16 %v264
    %v823 = vunpack.c.l.b16 %v265
    %v824 = vunpack.c.h.b16 %v265
    %v825 = vunpack.c.l.b16 %v266
    %v826 = vunpack.c.h.b16 %v266
    %v827 = vunpack.c.l.b16 %v267
    %v828 = vunpack.c.h.b16 %v267
    %v829 = vunpack.c.l.b16 %v268
    %v830 = vunpack.c.h.b16 %v268
    %v831 = vunpack.c.l.b16 %v269
    %v832 = vunpack.c.h.b16 %v269
    %v833 = vunpack.c.l.b16 %v270
    %v834 = vunpack.c.h.b16 %v270
    %v835 = vunpack.c.l.b16 %v271
    %v836 = vunpack.c.h.b16 %v271
    %v837 = vunpack.c.l.b16 %v272
    %v838 = vunpack.c.h.b16 %v272
    %v839 = vunpack.c.l.b16 %v273
    %v840 = vunpack.c.h.b16 %v273
    %v841 = vunpack.c.l.b16 %v274
    %v842 = vunpack.c.h.b16 %v274
    %v843 = vunpack.c.l.b16 %v275
    %v844 = vunpack.c.h.b16 %v275
    %v845 = vunpack.c.l.b16 %v276
    %v846 = vunpack.c.h.b16 %v276
    %v847 = vunpack.c.l.b16 %v277
    %v848 = vunpack.c.h.b16 %v277
    %v849 = vunpack.c.l.b16 %v278
    %v850 = vunpack.c.h.b16 %v278
    %v851 = vunpack.c.l.b16 %v279
    %v852 = vunpack.c.h.b16 %v279
    %v853 = vunpack.c.l.b16 %v280
    %v854 = vunpack.c.h.b16 %v280
    %v855 = vunpack.c.l.b16 %v281
    %v856 = vunpack.c.h.b16 %v281
    %v857 = vunpack.c.l.b16 %v282
    %v858 = vunpack.c.h.b16 %v282
    %v859 = vunpack.c.l.b16 %v283
    %v860 = vunpack.c.h.b16 %v283
    %v861 = vunpack.c.l.b16 %v284
    %v862 = vunpack.c.h.b16 %v284
    %v863 = vunpack.c.l.b16 %v285
    %v864 = vunpack.c.h.b16 %v285
    %v865 = vunpack.c.l.b16 %v286
    %v866 = vunpack.c.h.b16 %v286
    %v867 = vunpack.c.l.b16 %v287
    %v868 = vunpack.c.h.b16 %v287
    %v869 = vunpack.c.l.b16 %v288
    %v870 = vunpack.c.h.b16 %v288
    %v871 = vunpack.c.l.b16 %v289
    %v872 = vunpack.c.h.b16 %v289
    %v873 = vunpack.c.l.b16 %v290
    %v874 = vunpack.c.h.b16 %v290
    %v875 = vunpack.c.l.b16 %v291
    %v876 = vunpack.c.h.b16 %v291
    %v877 = vunpack.c.l.b16 %v292
    %v878 = vunpack.c.h.b16 %v292
    %v879 = vunpack.c.l.b16 %v293
    %v880 = vunpack.c.h.b16 %v293
    %v881 = vunpack.c.l.b16 %v294
    %v882 = vunpack.c.h.b16 %v294
    %v883 = vunpack.c.l.b16 %v295
    %v884 = vunpack.c.h.b16 %v295
    %v885 = vunpack.c.l.b16 %v296
    %v886 = vunpack.c.h.b16 %v296
    %v887 = vunpack.c.l.b16 %v297
    %v888 = vunpack.c.h.b16 %v297
    %v889 = vunpack.c.l.b16 %v298
    %v890 = vunpack.c.h.b16 %v298
    %v891 = vunpack.c.l.b16 %v299
    %v892 = vunpack.c.h.b16 %v299
    %v893 = vunpack.c.l.b16 %v300
    %v894 = vunpack.c.h.b16 %v300
    %v895 = vunpack.c.l.b16 %v301
    %v896 = vunpack.c.h.b16 %v301
    %v897 = vunpack.c.l.b16 %v302
    %v898 = vunpack.c.h.b16 %v302
    %v899 = vunpack.c.l.b16 %v303
    %v900 = vunpack.c.h.b16 %v303
    %v901 = vunpack.c.l.b16 %v304
    %v902 = vunpack.c.h.b16 %v304
    %v903 = vunpack.c.l.b16 %v305
    %v904 = vunpack.c.h.b16 %v305
    %v905 = vunpack.c.l.b16 %v306
    %v906 = vunpack.c.h.b16 %v306
    %v907 = vunpack.c.l.b16 %v307
    %v908 = vunpack.c.h.b16 %v307
    %v909 = vunpack.c.l.b16 %v308
    %v910 = vunpack.c.h.b16 %v308
    %v911 = vunpack.c.l.b16 %v309
    %v912 = vunpack.c.h.b16 %v309
    %v913 = vunpack.c.l.b16 %v310
    %v914 = vunpack.c.h.b16 %v310
    %v915 = vunpack.c.l.b16 %v311
    %v916 = vunpack.c.h.b16 %v311
    %v917 = vunpack.c.l.b16 %v312
    %v918 = vunpack.c.h.b16 %v312
    %v919 = vunpack.c.l.b16 %v313
    %v920 = vunpack.c.h.b16 %v313
    %v921 = vunpack.c.l.b16 %v314
    %v922 = vunpack.c.h.b16 %v314
    %v923 = vunpack.c.l.b16 %v315
    %v924 = vunpack.c.h.b16 %v315
    %v925 = vunpack.c.l.b16 %v316
    %v926 = vunpack.c.h.b16 %v316
    %v927 = vpack.c.b16 %v539, %v535
    %v928 = vpack.c.b16 %v540, %v536
    %v929 = vpack.c.b16 %v541, %v537
    %v930 = vpack.c.b16 %v542, %v538
    %v931 = vpack.c.b16 %v547, %v543
    %v932 = vpack.c.b16 %v548, %v544
    %v933 = vpack.c.b16 %v549, %v545
    %v934 = vpack.c.b16 %v550, %v546
    %v935 = vpack.c.b16 %v555, %v551
    %v936 = vpack.c.b16 %v556, %v552
    %v937 = vpack.c.b16 %v557, %v553
    %v938 = vpack.c.b16 %v558, %v554
    %v939 = vpack.c.b16 %v563, %v559
    %v940 = vpack.c.b16 %v564, %v560
    %v941 = vpack.c.b16 %v565, %v561
    %v942 = vpack.c.b16 %v566, %v562
    %v943 = vpack.c.b16 %v571, %v567
    %v944 = vpack.c.b16 %v572, %v568
    %v945 = vpack.c.b16 %v573, %v569
    %v946 = vpack.c.b16 %v574, %v570
    %v947 = vpack.c.b16 %v579, %v575
    %v948 = vpack.c.b16 %v580, %v576
    %v949 = vpack.c.b16 %v581, %v577
    %v950 = vpack.c.b16 %v582, %v578
    %v951 = vpack.c.b16 %v587, %v583
    %v952 = vpack.c.b16 %v588, %v584
    %v953 = vpack.c.b16 %v589, %v585
    %v954 = vpack.c.b16 %v590, %v586
    %v955 = vpack.c.b16 %v595, %v591
    %v956 = vpack.c.b16 %v596, %v592
    %v957 = vpack.c.b16 %v597, %v593
    %v958 = vpack.c.b16 %v598, %v594
    %v959 = vpack.c.b16 %v603, %v599
    %v960 = vpack.c.b16 %v604, %v600
    %v961 = vpack.c.b16 %v605, %v601
    %v962 = vpack.c.b16 %v606, %v602
    %v963 = vpack.c.b16 %v611, %v607
    %v964 = vpack.c.b16 %v612, %v608
    %v965 = vpack.c.b16 %v613, %v609
    %v966 = vpack.c.b16 %v614, %v610
    %v967 = vpack.c.b16 %v619, %v615
    %v968 = vpack.c.b16 %v620, %v616
    %v969 = vpack.c.b16 %v621, %v617
    %v970 = vpack.c.b16 %v622, %v618
    %v971 = vpack.c.b16 %v627, %v623
    %v972 = vpack.c.b16 %v628, %v624
    %v973 = vpack.c.b16 %v629, %v625
    %v974 = vpack.c.b16 %v630, %v626
    %v975 = vpack.c.b16 %v635, %v631
    %v976 = vpack.c.b16 %v636, %v632
    %v977 = vpack.c.b16 %v637, %v633
    %v978 = vpack.c.b16 %v638, %v634
    %v979 = vpack.c.b16 %v643, %v639
    %v980 = vpack.c.b16 %v644, %v640
    %v981 = vpack.c.b16 %v645, %v641
    %v982 = vpack.c.b16 %v646, %v642
    %v983 = vpack.c.b16 %v651, %v647
    %v984 = vpack.c.b16 %v652, %v648
    %v985 = vpack.c.b16 %v653, %v649
    %v986 = vpack.c.b16 %v654, %v650
    %v987 = vpack.c.b16 %v659, %v655
    %v988 = vpack.c.b16 %v660, %v656
    %v989 = vpack.c.b16 %v661, %v657
    %v990 = vpack.c.b16 %v662, %v658
    %v991 = vpack.c.b16 %v667, %v663
    %v992 = vpack.c.b16 %v668, %v664
    %v993 = vpack.c.b16 %v669, %v665
    %v994 = vpack.c.b16 %v670, %v666
    %v995 = vpack.c.b16 %v675, %v671
    %v996 = vpack.c.b16 %v676, %v672
    %v997 = vpack.c.b16 %v677, %v673
    %v998 = vpack.c.b16 %v678, %v674
    %v999 = vpack.c.b16 %v683, %v679
    %v1000 = vpack.c.b16 %v684, %v680
    %v1001 = vpack.c.b16 %v685, %v681
    %v1002 = vpack.c.b16 %v686, %v682
    %v1003 = vpack.c.b16 %v691, %v687
    %v1004 = vpack.c.b16 %v692, %v688
    %v1005 = vpack.c.b16 %v693, %v689
    %v1006 = vpack.c.b16 %v694, %v690
    %v1007 = vpack.c.b16 %v699, %v695
    %v1008 = vpack.c.b16 %v700, %v696
    %v1009 = vpack.c.b16 %v701, %v697
    %v1010 = vpack.c.b16 %v702, %v698
    %v1011 = vpack.c.b16 %v707, %v703
    %v1012 = vpack.c.b16 %v708, %v704
    %v1013 = vpack.c.b16 %v709, %v705
    %v1014 = vpack.c.b16 %v710, %v706
    %v1015 = vpack.c.b16 %v715, %v711
    %v1016 = vpack.c.b16 %v716, %v712
    %v1017 = vpack.c.b16 %v717, %v713
    %v1018 = vpack.c.b16 %v718, %v714
    %v1019 = vpack.c.b16 %v723, %v719
    %v1020 = vpack.c.b16 %v724, %v720
    %v1021 = vpack.c.b16 %v725, %v721
    %v1022 = vpack.c.b16 %v726, %v722
    %v1023 = vpack.c.b16 %v731, %v727
    %v1024 = vpack.c.b16 %v732, %v728
    %v1025 = vpack.c.b16 %v733, %v729
    %v1026 = vpack.c.b16 %v734, %v730
    %v1027 = vpack.c.b16 %v739, %v735
    %v1028 = vpack.c.b16 %v740, %v736
    %v1029 = vpack.c.b16 %v741, %v737
    %v1030 = vpack.c.b16 %v742, %v738
    %v1031 = vpack.c.b16 %v747, %v743
    %v1032 = vpack.c.b16 %v748, %v744
    %v1033 = vpack.c.b16 %v749, %v745
    %v1034 = vpack.c.b16 %v750, %v746
    %v1035 = vpack.c.b16 %v755, %v751
    %v1036 = vpack.c.b16 %v756, %v752
    %v1037 = vpack.c.b16 %v757, %v753
    %v1038 = vpack.c.b16 %v758, %v754
    %v1039 = vpack.c.b16 %v763, %v759
    %v1040 = vpack.c.b16 %v764, %v760
    %v1041 = vpack.c.b16 %v765, %v761
    %v1042 = vpack.c.b16 %v766, %v762
    %v1043 = vpack.c.b16 %v771, %v767
    %v1044 = vpack.c.b16 %v772, %v768
    %v1045 = vpack.c.b16 %v773, %v769
    %v1046 = vpack.c.b16 %v774, %v770
    %v1047 = vpack.c.b16 %v779, %v775
    %v1048 = vpack.c.b16 %v780, %v776
    %v1049 = vpack.c.b16 %v781, %v777
    %v1050 = vpack.c.b16 %v782, %v778
    %v1051 = vpack.c.b16 %v787, %v783
    %v1052 = vpack.c.b16 %v788, %v784
    %v1053 = vpack.c.b16 %v789, %v785
    %v1054 = vpack.c.b16 %v790, %v786
    %v1055 = vpack.c.b16 %v795, %v791
    %v1056 = vpack.c.b16 %v796, %v792
    %v1057 = vpack.c.b16 %v797, %v793
    %v1058 = vpack.c.b16 %v798, %v794
    %v1059 = vpack.c.b16 %v803, %v799
    %v1060 = vpack.c.b16 %v804, %v800
    %v1061 = vpack.c.b16 %v805, %v801
    %v1062 = vpack.c.b16 %v806, %v802
    %v1063 = vpack.c.b16 %v811, %v807
    %v1064 = vpack.c.b16 %v812, %v808
    %v1065 = vpack.c.b16 %v813, %v809
    %v1066 = vpack.c.b16 %v814, %v810
    %v1067 = vpack.c.b16 %v819, %v815
    %v1068 = vpack.c.b16 %v820, %v816
    %v1069 = vpack.c.b16 %v821, %v817
    %v1070 = vpack.c.b16 %v822, %v818
    %v1071 = vpack.c.b16 %v827, %v823
    %v1072 = vpack.c.b16 %v828, %v824
    %v1073 = vpack.c.b16 %v829, %v825
    %v1074 = vpack.c.b16 %v830, %v826
    %v1075 = vpack.c.b16 %v835, %v831
    %v1076 = vpack.c.b16 %v836, %v832
    %v1077 = vpack.c.b16 %v837, %v833
    %v1078 = vpack.c.b16 %v838, %v834
    %v1079 = vpack.c.b16 %v843, %v839
    %v1080 = vpack.c.b16 %v844, %v840
    %v1081 = vpack.c.b16 %v845, %v841
    %v1082 = vpack.c.b16 %v846, %v842
    %v1083 = vpack.c.b16 %v851, %v847
    %v1084 = vpack.c.b16 %v852, %v848
    %v1085 = vpack.c.b16 %v853, %v849
    %v1086 = vpack.c.b16 %v854, %v850
    %v1087 = vpack.c.b16 %v859, %v855
    %v1088 = vpack.c.b16 %v860, %v856
    %v1089 = vpack.c.b16 %v861, %v857
    %v1090 = vpack.c.b16 %v862, %v858
    %v1091 = vpack.c.b16 %v867, %v863
    %v1092 = vpack.c.b16 %v868, %v864
    %v1093 = vpack.c.b16 %v869, %v865
    %v1094 = vpack.c.b16 %v870, %v866
    %v1095 = vpack.c.b16 %v875, %v871
    %v1096 = vpack.c.b16 %v876, %v872
    %v1097 = vpack.c.b16 %v877, %v873
    %v1098 = vpack.c.b16 %v878, %v874
    %v1099 = vpack.c.b16 %v883, %v879
    %v1100 = vpack.c.b16 %v884, %v880
    %v1101 = vpack.c.b16 %v885, %v881
    %v1102 = vpack.c.b16 %v886, %v882
    %v1103 = vpack.c.b16 %v891, %v887
    %v1104 = vpack.c.b16 %v892, %v888
    %v1105 = vpack.c.b16 %v893, %v889
    %v1106 = vpack.c.b16 %v894, %v890
    %v1107 = vpack.c.b16 %v899, %v895
    %v1108 = vpack.c.b16 %v900, %v896
    %v1109 = vpack.c.b16 %v901, %v897
    %v1110 = vpack.c.b16 %v902, %v898
    %v1111 = vpack.c.b16 %v907, %v903
    %v1112 = vpack.c.b16 %v908, %v904
    %v1113 = vpack.c.b16 %v909, %v905
    %v1114 = vpack.c.b16 %v910, %v906
    %v1115 = vpack.c.b16 %v915, %v911
    %v1116 = vpack.c.b16 %v916, %v912
    %v1117 = vpack.c.b16 %v917, %v913
    %v1118 = vpack.c.b16 %v918, %v914
    %v1119 = vpack.c.b16 %v923, %v919
    %v1120 = vpack.c.b16 %v924, %v920
    %v1121 = vpack.c.b16 %v925, %v921
    %v1122 = vpack.c.b16 %v926, %v922
    %vm1319 = vcmask 130048
    %v1321 = vsel %vm1319, %v120, 0
    %1323 = vmatprep.subr.bf16.mxu0 %v956
    %1324 = vmatpush1.bf16.msra.mxu0 %v955
    %1325 = vmatprep.subr.bf16.mxu0 %v952
    %1326 = vmatpush1.bf16.msra.mxu0 %v951
    %1327 = vmatprep.subr.bf16.mxu0 %v948
    %1328 = vmatpush1.bf16.msra.mxu0 %v947
    %1329 = vmatprep.subr.bf16.mxu0 %v944
    %1330 = vmatpush1.bf16.msra.mxu0 %v943
    %1331 = vmatprep.subr.bf16.mxu0 %v940
    %1332 = vmatpush1.bf16.msra.mxu0 %v939
    %1333 = vmatprep.subr.bf16.mxu0 %v936
    %1334 = vmatpush1.bf16.msra.mxu0 %v935
    %1335 = vmatprep.subr.bf16.mxu0 %v932
    %1336 = vmatpush1.bf16.msra.mxu0 %v931
    %1337 = vmatprep.subr.bf16.mxu0 %v928
    %1338 = vmatpush1.bf16.msra.mxu0 %v927
    %1339 = vmatprep.subr.bf16.mxu0 %v988
    %1340 = vmatpush2.bf16.msra.mxu0 %v987
    %1341 = vmatprep.subr.bf16.mxu0 %v984
    %1342 = vmatpush2.bf16.msra.mxu0 %v983
    %1343 = vmatprep.subr.bf16.mxu0 %v980
    %1344 = vmatpush2.bf16.msra.mxu0 %v979
    %1345 = vmatprep.subr.bf16.mxu0 %v976
    %1346 = vmatpush2.bf16.msra.mxu0 %v975
    %1347 = vmatprep.subr.bf16.mxu0 %v972
    %1348 = vmatpush2.bf16.msra.mxu0 %v971
    %1349 = vmatprep.subr.bf16.mxu0 %v968
    %1350 = vmatpush2.bf16.msra.mxu0 %v967
    %1351 = vmatprep.subr.bf16.mxu0 %v964
    %1352 = vmatpush2.bf16.msra.mxu0 %v963
    %1353 = vmatprep.subr.bf16.mxu0 %v960
    %1354 = vmatpush2.bf16.msra.mxu0 %v959
    %1355 = vmatprep.mubr.bf16.mxu0 %v115
    %1356 = vmatmul.mubr.bf16.gmra.mxu0 %v114
    %v1357 = vpop.f32.mrf.mxu0
    %v1358 = vadd.f32 %v322, %v1357
    %v1359 = vpop.f32.mrf.mxu0
    %v1360 = vadd.f32 %v326, %v1359
    %v1361 = vpop.f32.mrf.mxu0
    %v1362 = vpop.f32.mrf.mxu0
    %1363 = vdwg.mxu0
    %1364 = vmatprep.subr.bf16.mxu0 %v1020
    %1365 = vmatpush1.bf16.msra.mxu0 %v1019
    %1366 = vmatprep.subr.bf16.mxu0 %v1016
    %1367 = vmatpush1.bf16.msra.mxu0 %v1015
    %1368 = vmatprep.subr.bf16.mxu0 %v1012
    %1369 = vmatpush1.bf16.msra.mxu0 %v1011
    %1370 = vmatprep.subr.bf16.mxu0 %v1008
    %1371 = vmatpush1.bf16.msra.mxu0 %v1007
    %1372 = vmatprep.subr.bf16.mxu0 %v1004
    %1373 = vmatpush1.bf16.msra.mxu0 %v1003
    %1374 = vmatprep.subr.bf16.mxu0 %v1000
    %1375 = vmatpush1.bf16.msra.mxu0 %v999
    %1376 = vmatprep.subr.bf16.mxu0 %v996
    %1377 = vmatpush1.bf16.msra.mxu0 %v995
    %1378 = vmatprep.subr.bf16.mxu0 %v992
    %1379 = vmatpush1.bf16.msra.mxu0 %v991
    %1380 = vmatprep.subr.bf16.mxu0 %v1052
    %1381 = vmatpush2.bf16.msra.mxu0 %v1051
    %1382 = vmatprep.subr.bf16.mxu0 %v1048
    %1383 = vmatpush2.bf16.msra.mxu0 %v1047
    %1384 = vmatprep.subr.bf16.mxu0 %v1044
    %1385 = vmatpush2.bf16.msra.mxu0 %v1043
    %1386 = vmatprep.subr.bf16.mxu0 %v1040
    %1387 = vmatpush2.bf16.msra.mxu0 %v1039
    %1388 = vmatprep.subr.bf16.mxu0 %v1036
    %1389 = vmatpush2.bf16.msra.mxu0 %v1035
    %1390 = vmatprep.subr.bf16.mxu0 %v1032
    %1391 = vmatpush2.bf16.msra.mxu0 %v1031
    %1392 = vmatprep.subr.bf16.mxu0 %v1028
    %1393 = vmatpush2.bf16.msra.mxu0 %v1027
    %1394 = vmatprep.subr.bf16.mxu0 %v1024
    %1395 = vmatpush2.bf16.msra.mxu0 %v1023
    %1396 = vmatprep.mubr.bf16.mxu0 %v117
    %1397 = vmatmul.mubr.bf16.gmra.mxu0 %v116
    %v1398 = vpop.f32.mrf.mxu0
    %v1399 = vadd.f32 %v1358, %v1398
    %v1400 = vpop.f32.mrf.mxu0
    %v1401 = vadd.f32 %v1360, %v1400
    %v1402 = vpop.f32.mrf.mxu0
    %v1403 = vpop.f32.mrf.mxu0
    %1404 = vdwg.mxu0
    %1405 = vmatprep.subr.bf16.mxu0 %v1084
    %1406 = vmatpush1.bf16.msra.mxu0 %v1083
    %1407 = vmatprep.subr.bf16.mxu0 %v1080
    %1408 = vmatpush1.bf16.msra.mxu0 %v1079
    %1409 = vmatprep.subr.bf16.mxu0 %v1076
    %1410 = vmatpush1.bf16.msra.mxu0 %v1075
    %1411 = vmatprep.subr.bf16.mxu0 %v1072
    %1412 = vmatpush1.bf16.msra.mxu0 %v1071
    %1413 = vmatprep.subr.bf16.mxu0 %v1068
    %1414 = vmatpush1.bf16.msra.mxu0 %v1067
    %1415 = vmatprep.subr.bf16.mxu0 %v1064
    %1416 = vmatpush1.bf16.msra.mxu0 %v1063
    %1417 = vmatprep.subr.bf16.mxu0 %v1060
    %1418 = vmatpush1.bf16.msra.mxu0 %v1059
    %1419 = vmatprep.subr.bf16.mxu0 %v1056
    %1420 = vmatpush1.bf16.msra.mxu0 %v1055
    %1421 = vmatprep.subr.bf16.mxu0 %v1116
    %1422 = vmatpush2.bf16.msra.mxu0 %v1115
    %1423 = vmatprep.subr.bf16.mxu0 %v1112
    %1424 = vmatpush2.bf16.msra.mxu0 %v1111
    %1425 = vmatprep.subr.bf16.mxu0 %v1108
    %1426 = vmatpush2.bf16.msra.mxu0 %v1107
    %1427 = vmatprep.subr.bf16.mxu0 %v1104
    %1428 = vmatpush2.bf16.msra.mxu0 %v1103
    %1429 = vmatprep.subr.bf16.mxu0 %v1100
    %1430 = vmatpush2.bf16.msra.mxu0 %v1099
    %1431 = vmatprep.subr.bf16.mxu0 %v1096
    %1432 = vmatpush2.bf16.msra.mxu0 %v1095
    %1433 = vmatprep.subr.bf16.mxu0 %v1092
    %1434 = vmatpush2.bf16.msra.mxu0 %v1091
    %1435 = vmatprep.subr.bf16.mxu0 %v1088
    %1436 = vmatpush2.bf16.msra.mxu0 %v1087
    %1437 = vmatprep.mubr.bf16.mxu0 %v119
    %1438 = vmatmul.mubr.bf16.gmra.mxu0 %v118
    %v1439 = vpop.f32.mrf.mxu0
    %v1440 = vadd.f32 %v1399, %v1439
    %v1441 = vpop.f32.mrf.mxu0
    %v1442 = vadd.f32 %v1401, %v1441
    %v1443 = vpop.f32.mrf.mxu0
    %v1444 = vpop.f32.mrf.mxu0
    %1445 = vdwg.mxu0
    %1446 = vmatprep.subr.bf16.mxu0 0
    %1447 = vmatpush1.bf16.msra.mxu0 0
    %1448 = vmatprep.subr.bf16.mxu0 0
    %1449 = vmatpush1.bf16.msra.mxu0 0
    %1450 = vmatprep.subr.bf16.mxu0 0
    %1451 = vmatpush1.bf16.msra.mxu0 0
    %1452 = vmatprep.subr.bf16.mxu0 0
    %1453 = vmatpush1.bf16.msra.mxu0 0
    %1454 = vmatprep.subr.bf16.mxu0 0
    %1455 = vmatpush1.bf16.msra.mxu0 0
    %1456 = vmatprep.subr.bf16.mxu0 0
    %1457 = vmatpush1.bf16.msra.mxu0 0
    %1458 = vmatprep.subr.bf16.mxu0 0
    %1459 = vmatpush1.bf16.msra.mxu0 0
    %1460 = vmatprep.subr.bf16.mxu0 %v1120
    %1461 = vmatpush1.bf16.msra.mxu0 %v1119
    %1462 = vmatprep.subr.bf16.mxu0 0
    %1463 = vmatpush2.bf16.msra.mxu0 0
    %1464 = vmatprep.subr.bf16.mxu0 0
    %1465 = vmatpush2.bf16.msra.mxu0 0
    %1466 = vmatprep.subr.bf16.mxu0 0
    %1467 = vmatpush2.bf16.msra.mxu0 0
    %1468 = vmatprep.subr.bf16.mxu0 0
    %1469 = vmatpush2.bf16.msra.mxu0 0
    %1470 = vmatprep.subr.bf16.mxu0 0
    %1471 = vmatpush2.bf16.msra.mxu0 0
    %1472 = vmatprep.subr.bf16.mxu0 0
    %1473 = vmatpush2.bf16.msra.mxu0 0
    %1474 = vmatprep.subr.bf16.mxu0 0
    %1475 = vmatpush2.bf16.msra.mxu0 0
    %1476 = vmatprep.subr.bf16.mxu0 0
    %1477 = vmatpush2.bf16.msra.mxu0 0
    %1478 = vmatprep.mubr.bf16.mxu0 0
    %1479 = vmatmul.mubr.bf16.gmra.mxu0 %v1321
    %v1480 = vpop.f32.mrf.mxu0
    %v1481 = vadd.f32 %v1440, %v1480
    %v1482 = vpop.f32.mrf.mxu0
    %v1483 = vadd.f32 %v1442, %v1482
    %v1484 = vpop.f32.mrf.mxu0
    %v1485 = vpop.f32.mrf.mxu0
    %1486 = vdwg.mxu0
    %1487 = vmatprep.subr.bf16.mxu0 %v958
    %1488 = vmatpush1.bf16.msra.mxu0 %v957
    %1489 = vmatprep.subr.bf16.mxu0 %v954
    %1490 = vmatpush1.bf16.msra.mxu0 %v953
    %1491 = vmatprep.subr.bf16.mxu0 %v950
    %1492 = vmatpush1.bf16.msra.mxu0 %v949
    %1493 = vmatprep.subr.bf16.mxu0 %v946
    %1494 = vmatpush1.bf16.msra.mxu0 %v945
    %1495 = vmatprep.subr.bf16.mxu0 %v942
    %1496 = vmatpush1.bf16.msra.mxu0 %v941
    %1497 = vmatprep.subr.bf16.mxu0 %v938
    %1498 = vmatpush1.bf16.msra.mxu0 %v937
    %1499 = vmatprep.subr.bf16.mxu0 %v934
    %1500 = vmatpush1.bf16.msra.mxu0 %v933
    %1501 = vmatprep.subr.bf16.mxu0 %v930
    %1502 = vmatpush1.bf16.msra.mxu0 %v929
    %1503 = vmatprep.subr.bf16.mxu0 %v990
    %1504 = vmatpush2.bf16.msra.mxu0 %v989
    %1505 = vmatprep.subr.bf16.mxu0 %v986
    %1506 = vmatpush2.bf16.msra.mxu0 %v985
    %1507 = vmatprep.subr.bf16.mxu0 %v982
    %1508 = vmatpush2.bf16.msra.mxu0 %v981
    %1509 = vmatprep.subr.bf16.mxu0 %v978
    %1510 = vmatpush2.bf16.msra.mxu0 %v977
    %1511 = vmatprep.subr.bf16.mxu0 %v974
    %1512 = vmatpush2.bf16.msra.mxu0 %v973
    %1513 = vmatprep.subr.bf16.mxu0 %v970
    %1514 = vmatpush2.bf16.msra.mxu0 %v969
    %1515 = vmatprep.subr.bf16.mxu0 %v966
    %1516 = vmatpush2.bf16.msra.mxu0 %v965
    %1517 = vmatprep.subr.bf16.mxu0 %v962
    %1518 = vmatpush2.bf16.msra.mxu0 %v961
    %1519 = vmatprep.mubr.bf16.mxu0 %v115
    %1520 = vmatmul.mubr.bf16.gmra.mxu0 %v114
    %v1521 = vpop.f32.mrf.mxu0
    %v1522 = vadd.f32 %v330, %v1521
    %v1523 = vpop.f32.mrf.mxu0
    %v1524 = vadd.f32 %v334, %v1523
    %v1525 = vpop.f32.mrf.mxu0
    %v1526 = vpop.f32.mrf.mxu0
    %1527 = vdwg.mxu0
    %1528 = vmatprep.subr.bf16.mxu0 %v1022
    %1529 = vmatpush1.bf16.msra.mxu0 %v1021
    %1530 = vmatprep.subr.bf16.mxu0 %v1018
    %1531 = vmatpush1.bf16.msra.mxu0 %v1017
    %1532 = vmatprep.subr.bf16.mxu0 %v1014
    %1533 = vmatpush1.bf16.msra.mxu0 %v1013
    %1534 = vmatprep.subr.bf16.mxu0 %v1010
    %1535 = vmatpush1.bf16.msra.mxu0 %v1009
    %1536 = vmatprep.subr.bf16.mxu0 %v1006
    %1537 = vmatpush1.bf16.msra.mxu0 %v1005
    %1538 = vmatprep.subr.bf16.mxu0 %v1002
    %1539 = vmatpush1.bf16.msra.mxu0 %v1001
    %1540 = vmatprep.subr.bf16.mxu0 %v998
    %1541 = vmatpush1.bf16.msra.mxu0 %v997
    %1542 = vmatprep.subr.bf16.mxu0 %v994
    %1543 = vmatpush1.bf16.msra.mxu0 %v993
    %1544 = vmatprep.subr.bf16.mxu0 %v1054
    %1545 = vmatpush2.bf16.msra.mxu0 %v1053
    %1546 = vmatprep.subr.bf16.mxu0 %v1050
    %1547 = vmatpush2.bf16.msra.mxu0 %v1049
    %1548 = vmatprep.subr.bf16.mxu0 %v1046
    %1549 = vmatpush2.bf16.msra.mxu0 %v1045
    %1550 = vmatprep.subr.bf16.mxu0 %v1042
    %1551 = vmatpush2.bf16.msra.mxu0 %v1041
    %1552 = vmatprep.subr.bf16.mxu0 %v1038
    %1553 = vmatpush2.bf16.msra.mxu0 %v1037
    %1554 = vmatprep.subr.bf16.mxu0 %v1034
    %1555 = vmatpush2.bf16.msra.mxu0 %v1033
    %1556 = vmatprep.subr.bf16.mxu0 %v1030
    %1557 = vmatpush2.bf16.msra.mxu0 %v1029
    %1558 = vmatprep.subr.bf16.mxu0 %v1026
    %1559 = vmatpush2.bf16.msra.mxu0 %v1025
    %1560 = vmatprep.mubr.bf16.mxu0 %v117
    %1561 = vmatmul.mubr.bf16.gmra.mxu0 %v116
    %v1562 = vpop.f32.mrf.mxu0
    %v1563 = vadd.f32 %v1522, %v1562
    %v1564 = vpop.f32.mrf.mxu0
    %v1565 = vadd.f32 %v1524, %v1564
    %v1566 = vpop.f32.mrf.mxu0
    %v1567 = vpop.f32.mrf.mxu0
    %1568 = vdwg.mxu0
    %1569 = vmatprep.subr.bf16.mxu0 %v1086
    %1570 = vmatpush1.bf16.msra.mxu0 %v1085
    %1571 = vmatprep.subr.bf16.mxu0 %v1082
    %1572 = vmatpush1.bf16.msra.mxu0 %v1081
    %1573 = vmatprep.subr.bf16.mxu0 %v1078
    %1574 = vmatpush1.bf16.msra.mxu0 %v1077
    %1575 = vmatprep.subr.bf16.mxu0 %v1074
    %1576 = vmatpush1.bf16.msra.mxu0 %v1073
    %1577 = vmatprep.subr.bf16.mxu0 %v1070
    %1578 = vmatpush1.bf16.msra.mxu0 %v1069
    %1579 = vmatprep.subr.bf16.mxu0 %v1066
    %1580 = vmatpush1.bf16.msra.mxu0 %v1065
    %1581 = vmatprep.subr.bf16.mxu0 %v1062
    %1582 = vmatpush1.bf16.msra.mxu0 %v1061
    %1583 = vmatprep.subr.bf16.mxu0 %v1058
    %1584 = vmatpush1.bf16.msra.mxu0 %v1057
    %1585 = vmatprep.subr.bf16.mxu0 %v1118
    %1586 = vmatpush2.bf16.msra.mxu0 %v1117
    %1587 = vmatprep.subr.bf16.mxu0 %v1114
    %1588 = vmatpush2.bf16.msra.mxu0 %v1113
    %1589 = vmatprep.subr.bf16.mxu0 %v1110
    %1590 = vmatpush2.bf16.msra.mxu0 %v1109
    %1591 = vmatprep.subr.bf16.mxu0 %v1106
    %1592 = vmatpush2.bf16.msra.mxu0 %v1105
    %1593 = vmatprep.subr.bf16.mxu0 %v1102
    %1594 = vmatpush2.bf16.msra.mxu0 %v1101
    %1595 = vmatprep.subr.bf16.mxu0 %v1098
    %1596 = vmatpush2.bf16.msra.mxu0 %v1097
    %1597 = vmatprep.subr.bf16.mxu0 %v1094
    %1598 = vmatpush2.bf16.msra.mxu0 %v1093
    %1599 = vmatprep.subr.bf16.mxu0 %v1090
    %1600 = vmatpush2.bf16.msra.mxu0 %v1089
    %1601 = vmatprep.mubr.bf16.mxu0 %v119
    %1602 = vmatmul.mubr.bf16.gmra.mxu0 %v118
    %v1603 = vpop.f32.mrf.mxu0
    %v1604 = vadd.f32 %v1563, %v1603
    %v1605 = vpop.f32.mrf.mxu0
    %v1606 = vadd.f32 %v1565, %v1605
    %v1607 = vpop.f32.mrf.mxu0
    %v1608 = vpop.f32.mrf.mxu0
    %1609 = vdwg.mxu0
    %1610 = vmatprep.subr.bf16.mxu0 0
    %1611 = vmatpush1.bf16.msra.mxu0 0
    %1612 = vmatprep.subr.bf16.mxu0 0
    %1613 = vmatpush1.bf16.msra.mxu0 0
    %1614 = vmatprep.subr.bf16.mxu0 0
    %1615 = vmatpush1.bf16.msra.mxu0 0
    %1616 = vmatprep.subr.bf16.mxu0 0
    %1617 = vmatpush1.bf16.msra.mxu0 0
    %1618 = vmatprep.subr.bf16.mxu0 0
    %1619 = vmatpush1.bf16.msra.mxu0 0
    %1620 = vmatprep.subr.bf16.mxu0 0
    %1621 = vmatpush1.bf16.msra.mxu0 0
    %1622 = vmatprep.subr.bf16.mxu0 0
    %1623 = vmatpush1.bf16.msra.mxu0 0
    %1624 = vmatprep.subr.bf16.mxu0 %v1122
    %1625 = vmatpush1.bf16.msra.mxu0 %v1121
    %1626 = vmatprep.subr.bf16.mxu0 0
    %1627 = vmatpush2.bf16.msra.mxu0 0
    %1628 = vmatprep.subr.bf16.mxu0 0
    %1629 = vmatpush2.bf16.msra.mxu0 0
    %1630 = vmatprep.subr.bf16.mxu0 0
    %1631 = vmatpush2.bf16.msra.mxu0 0
    %1632 = vmatprep.subr.bf16.mxu0 0
    %1633 = vmatpush2.bf16.msra.mxu0 0
    %1634 = vmatprep.subr.bf16.mxu0 0
    %1635 = vmatpush2.bf16.msra.mxu0 0
    %1636 = vmatprep.subr.bf16.mxu0 0
    %1637 = vmatpush2.bf16.msra.mxu0 0
    %1638 = vmatprep.subr.bf16.mxu0 0
    %1639 = vmatpush2.bf16.msra.mxu0 0
    %1640 = vmatprep.subr.bf16.mxu0 0
    %1641 = vmatpush2.bf16.msra.mxu0 0
    %1642 = vmatprep.mubr.bf16.mxu0 0
    %1643 = vmatmul.mubr.bf16.gmra.mxu0 %v1321
    %v1644 = vpop.f32.mrf.mxu0
    %v1645 = vadd.f32 %v1604, %v1644
    %v1646 = vpop.f32.mrf.mxu0
    %v1647 = vadd.f32 %v1606, %v1646
    %v1648 = vpop.f32.mrf.mxu0
    %v1649 = vpop.f32.mrf.mxu0
    %1650 = vdwg.mxu0
    %v1651 = vmax.f32 %v1481, 0.0
    %v1652 = vmax.f32 %v1483, 0.0
    %v1653 = vmax.f32 %v1645, 0.0
    %v1654 = vmax.f32 %v1647, 0.0
    %v1655 = vpack.c.bf16 %v1651, %v1651
    %v1656 = vpack.c.bf16 %v1652, %v1652
    %v1657 = vpack.c.bf16 %v1653, %v1653
    %v1658 = vpack.c.bf16 %v1654, %v1654
    %v1659 = vld [vmem:[#allocation7] sm:$0xff]
    %v1660 = vld [vmem:[#allocation7 + $0x8] sm:$0xff]
    %v1661 = vld [vmem:[#allocation7 + $0x10] sm:$0xff]
    %v1662 = vld [vmem:[#allocation7 + $0x18] sm:$0xff]
    %v1663 = vld [vmem:[#allocation7 + $0x20] sm:$0xff]
    %v1664 = vld [vmem:[#allocation7 + $0x28] sm:$0xff]
    %v1665 = vld [vmem:[#allocation7 + $0x30] sm:$0xff]
    %v1666 = vld [vmem:[#allocation7 + $0x38] sm:$0xff]
    %v1667 = vld [vmem:[#allocation7 + $0x40] sm:$0xff]
    %v1668 = vld [vmem:[#allocation7 + $0x48] sm:$0xff]
    %v1669 = vld [vmem:[#allocation7 + $0x50] sm:$0xff]
    %v1670 = vld [vmem:[#allocation7 + $0x58] sm:$0xff]
    %v1671 = vld [vmem:[#allocation7 + $0x60] sm:$0xff]
    %v1672 = vld [vmem:[#allocation7 + $0x68] sm:$0xff]
    %v1673 = vld [vmem:[#allocation7 + $0x70] sm:$0xff]
    %v1674 = vld [vmem:[#allocation7 + $0x78] sm:$0xff]
    %v1675 = vld [vmem:[#allocation7 + $0x80] sm:$0xff]
    %v1676 = vld [vmem:[#allocation7 + $0x88] sm:$0xff]
    %v1677 = vld [vmem:[#allocation7 + $0x90] sm:$0xff]
    %v1678 = vld [vmem:[#allocation7 + $0x98] sm:$0xff]
    %v1679 = vld [vmem:[#allocation7 + $0xa0] sm:$0xff]
    %v1680 = vld [vmem:[#allocation7 + $0xa8] sm:$0xff]
    %v1681 = vld [vmem:[#allocation7 + $0xb0] sm:$0xff]
    %v1682 = vld [vmem:[#allocation7 + $0xb8] sm:$0xff]
    %v1683 = vld [vmem:[#allocation7 + $0xc0] sm:$0xff]
    %v1684 = vld [vmem:[#allocation7 + $0xc8] sm:$0xff]
    %v1685 = vld [vmem:[#allocation7 + $0xd0] sm:$0xff]
    %v1686 = vld [vmem:[#allocation7 + $0xd8] sm:$0xff]
    %v1687 = vld [vmem:[#allocation7 + $0xe0] sm:$0xff]
    %v1688 = vld [vmem:[#allocation7 + $0xe8] sm:$0xff]
    %v1689 = vld [vmem:[#allocation7 + $0xf0] sm:$0xff]
    %v1690 = vld [vmem:[#allocation7 + $0xf8] sm:$0xff]
    %v1691 = vld [vmem:[#allocation7 + $0x100] sm:$0xff]
    %v1692 = vld [vmem:[#allocation7 + $0x108] sm:$0xff]
    %v1693 = vld [vmem:[#allocation7 + $0x110] sm:$0xff]
    %v1694 = vld [vmem:[#allocation7 + $0x118] sm:$0xff]
    %v1695 = vld [vmem:[#allocation7 + $0x120] sm:$0xff]
    %v1696 = vld [vmem:[#allocation7 + $0x128] sm:$0xff]
    %v1697 = vld [vmem:[#allocation7 + $0x130] sm:$0xff]
    %v1698 = vld [vmem:[#allocation7 + $0x138] sm:$0xff]
    %v1699 = vld [vmem:[#allocation7 + $0x140] sm:$0xff]
    %v1700 = vld [vmem:[#allocation7 + $0x148] sm:$0xff]
    %v1701 = vld [vmem:[#allocation7 + $0x150] sm:$0xff]
    %v1702 = vld [vmem:[#allocation7 + $0x158] sm:$0xff]
    %v1703 = vld [vmem:[#allocation7 + $0x160] sm:$0xff]
    %v1704 = vld [vmem:[#allocation7 + $0x168] sm:$0xff]
    %v1705 = vld [vmem:[#allocation7 + $0x170] sm:$0xff]
    %v1706 = vld [vmem:[#allocation7 + $0x178] sm:$0xff]
    %v1707 = vld [vmem:[#allocation7 + $0x180] sm:$0xff]
    %v1708 = vld [vmem:[#allocation7 + $0x188] sm:$0xff]
    %v1709 = vld [vmem:[#allocation7 + $0x190] sm:$0xff]
    %v1710 = vld [vmem:[#allocation7 + $0x198] sm:$0xff]
    %v1711 = vld [vmem:[#allocation7 + $0x1a0] sm:$0xff]
    %v1712 = vld [vmem:[#allocation7 + $0x1a8] sm:$0xff]
    %v1713 = vld [vmem:[#allocation7 + $0x1b0] sm:$0xff]
    %v1714 = vld [vmem:[#allocation7 + $0x1b8] sm:$0xff]
    %v1715 = vld [vmem:[#allocation7 + $0x1c0] sm:$0xff]
    %v1716 = vld [vmem:[#allocation7 + $0x1c8] sm:$0xff]
    %v1717 = vld [vmem:[#allocation7 + $0x1d0] sm:$0xff]
    %v1718 = vld [vmem:[#allocation7 + $0x1d8] sm:$0xff]
    %v1719 = vld [vmem:[#allocation7 + $0x1e0] sm:$0xff]
    %v1720 = vld [vmem:[#allocation7 + $0x1e8] sm:$0xff]
    %v1721 = vld [vmem:[#allocation7 + $0x1f0] sm:$0xff]
    %v1722 = vld [vmem:[#allocation7 + $0x1f8] sm:$0xff]
    %v1723 = vld [vmem:[%s4] sm:$0x3]
    %v1725 = vlaneseq
    %v1726 = vshrl.u32 %v1725, 7
    %v1727 = vsub.s32 0, %v1726
    %v1728 = vrot.slane %v1723, %v1727
    %v1729 = vlaneseq
    %v1730 = vshrl.u32 %v1729, 7
    %v1731 = vsub.s32 1, %v1730
    %v1732 = vrot.slane %v1723, %v1731
    %v1799 = vunpack.c.l.b16 %v1659
    %v1800 = vunpack.c.h.b16 %v1659
    %v1801 = vunpack.c.l.b16 %v1660
    %v1802 = vunpack.c.h.b16 %v1660
    %v1803 = vunpack.c.l.b16 %v1661
    %v1804 = vunpack.c.h.b16 %v1661
    %v1805 = vunpack.c.l.b16 %v1662
    %v1806 = vunpack.c.h.b16 %v1662
    %v1807 = vunpack.c.l.b16 %v1663
    %v1808 = vunpack.c.h.b16 %v1663
    %v1809 = vunpack.c.l.b16 %v1664
    %v1810 = vunpack.c.h.b16 %v1664
    %v1811 = vunpack.c.l.b16 %v1665
    %v1812 = vunpack.c.h.b16 %v1665
    %v1813 = vunpack.c.l.b16 %v1666
    %v1814 = vunpack.c.h.b16 %v1666
    %v1815 = vunpack.c.l.b16 %v1667
    %v1816 = vunpack.c.h.b16 %v1667
    %v1817 = vunpack.c.l.b16 %v1668
    %v1818 = vunpack.c.h.b16 %v1668
    %v1819 = vunpack.c.l.b16 %v1669
    %v1820 = vunpack.c.h.b16 %v1669
    %v1821 = vunpack.c.l.b16 %v1670
    %v1822 = vunpack.c.h.b16 %v1670
    %v1823 = vunpack.c.l.b16 %v1671
    %v1824 = vunpack.c.h.b16 %v1671
    %v1825 = vunpack.c.l.b16 %v1672
    %v1826 = vunpack.c.h.b16 %v1672
    %v1827 = vunpack.c.l.b16 %v1673
    %v1828 = vunpack.c.h.b16 %v1673
    %v1829 = vunpack.c.l.b16 %v1674
    %v1830 = vunpack.c.h.b16 %v1674
    %v1831 = vunpack.c.l.b16 %v1675
    %v1832 = vunpack.c.h.b16 %v1675
    %v1833 = vunpack.c.l.b16 %v1676
    %v1834 = vunpack.c.h.b16 %v1676
    %v1835 = vunpack.c.l.b16 %v1677
    %v1836 = vunpack.c.h.b16 %v1677
    %v1837 = vunpack.c.l.b16 %v1678
    %v1838 = vunpack.c.h.b16 %v1678
    %v1839 = vunpack.c.l.b16 %v1679
    %v1840 = vunpack.c.h.b16 %v1679
    %v1841 = vunpack.c.l.b16 %v1680
    %v1842 = vunpack.c.h.b16 %v1680
    %v1843 = vunpack.c.l.b16 %v1681
    %v1844 = vunpack.c.h.b16 %v1681
    %v1845 = vunpack.c.l.b16 %v1682
    %v1846 = vunpack.c.h.b16 %v1682
    %v1847 = vunpack.c.l.b16 %v1683
    %v1848 = vunpack.c.h.b16 %v1683
    %v1849 = vunpack.c.l.b16 %v1684
    %v1850 = vunpack.c.h.b16 %v1684
    %v1851 = vunpack.c.l.b16 %v1685
    %v1852 = vunpack.c.h.b16 %v1685
    %v1853 = vunpack.c.l.b16 %v1686
    %v1854 = vunpack.c.h.b16 %v1686
    %v1855 = vunpack.c.l.b16 %v1687
    %v1856 = vunpack.c.h.b16 %v1687
    %v1857 = vunpack.c.l.b16 %v1688
    %v1858 = vunpack.c.h.b16 %v1688
    %v1859 = vunpack.c.l.b16 %v1689
    %v1860 = vunpack.c.h.b16 %v1689
    %v1861 = vunpack.c.l.b16 %v1690
    %v1862 = vunpack.c.h.b16 %v1690
    %v1863 = vunpack.c.l.b16 %v1691
    %v1864 = vunpack.c.h.b16 %v1691
    %v1865 = vunpack.c.l.b16 %v1692
    %v1866 = vunpack.c.h.b16 %v1692
    %v1867 = vunpack.c.l.b16 %v1693
    %v1868 = vunpack.c.h.b16 %v1693
    %v1869 = vunpack.c.l.b16 %v1694
    %v1870 = vunpack.c.h.b16 %v1694
    %v1871 = vunpack.c.l.b16 %v1695
    %v1872 = vunpack.c.h.b16 %v1695
    %v1873 = vunpack.c.l.b16 %v1696
    %v1874 = vunpack.c.h.b16 %v1696
    %v1875 = vunpack.c.l.b16 %v1697
    %v1876 = vunpack.c.h.b16 %v1697
    %v1877 = vunpack.c.l.b16 %v1698
    %v1878 = vunpack.c.h.b16 %v1698
    %v1879 = vunpack.c.l.b16 %v1699
    %v1880 = vunpack.c.h.b16 %v1699
    %v1881 = vunpack.c.l.b16 %v1700
    %v1882 = vunpack.c.h.b16 %v1700
    %v1883 = vunpack.c.l.b16 %v1701
    %v1884 = vunpack.c.h.b16 %v1701
    %v1885 = vunpack.c.l.b16 %v1702
    %v1886 = vunpack.c.h.b16 %v1702
    %v1887 = vunpack.c.l.b16 %v1703
    %v1888 = vunpack.c.h.b16 %v1703
    %v1889 = vunpack.c.l.b16 %v1704
    %v1890 = vunpack.c.h.b16 %v1704
    %v1891 = vunpack.c.l.b16 %v1705
    %v1892 = vunpack.c.h.b16 %v1705
    %v1893 = vunpack.c.l.b16 %v1706
    %v1894 = vunpack.c.h.b16 %v1706
    %v1895 = vunpack.c.l.b16 %v1707
    %v1896 = vunpack.c.h.b16 %v1707
    %v1897 = vunpack.c.l.b16 %v1708
    %v1898 = vunpack.c.h.b16 %v1708
    %v1899 = vunpack.c.l.b16 %v1709
    %v1900 = vunpack.c.h.b16 %v1709
    %v1901 = vunpack.c.l.b16 %v1710
    %v1902 = vunpack.c.h.b16 %v1710
    %v1903 = vunpack.c.l.b16 %v1711
    %v1904 = vunpack.c.h.b16 %v1711
    %v1905 = vunpack.c.l.b16 %v1712
    %v1906 = vunpack.c.h.b16 %v1712
    %v1907 = vunpack.c.l.b16 %v1713
    %v1908 = vunpack.c.h.b16 %v1713
    %v1909 = vunpack.c.l.b16 %v1714
    %v1910 = vunpack.c.h.b16 %v1714
    %v1911 = vunpack.c.l.b16 %v1715
    %v1912 = vunpack.c.h.b16 %v1715
    %v1913 = vunpack.c.l.b16 %v1716
    %v1914 = vunpack.c.h.b16 %v1716
    %v1915 = vunpack.c.l.b16 %v1717
    %v1916 = vunpack.c.h.b16 %v1717
    %v1917 = vunpack.c.l.b16 %v1718
    %v1918 = vunpack.c.h.b16 %v1718
    %v1919 = vunpack.c.l.b16 %v1719
    %v1920 = vunpack.c.h.b16 %v1719
    %v1921 = vunpack.c.l.b16 %v1720
    %v1922 = vunpack.c.h.b16 %v1720
    %v1923 = vunpack.c.l.b16 %v1721
    %v1924 = vunpack.c.h.b16 %v1721
    %v1925 = vunpack.c.l.b16 %v1722
    %v1926 = vunpack.c.h.b16 %v1722
    %v1927 = vpack.c.b16 %v1801, %v1799
    %v1928 = vpack.c.b16 %v1802, %v1800
    %v1929 = vpack.c.b16 %v1805, %v1803
    %v1930 = vpack.c.b16 %v1806, %v1804
    %v1931 = vpack.c.b16 %v1809, %v1807
    %v1932 = vpack.c.b16 %v1810, %v1808
    %v1933 = vpack.c.b16 %v1813, %v1811
    %v1934 = vpack.c.b16 %v1814, %v1812
    %v1935 = vpack.c.b16 %v1817, %v1815
    %v1936 = vpack.c.b16 %v1818, %v1816
    %v1937 = vpack.c.b16 %v1821, %v1819
    %v1938 = vpack.c.b16 %v1822, %v1820
    %v1939 = vpack.c.b16 %v1825, %v1823
    %v1940 = vpack.c.b16 %v1826, %v1824
    %v1941 = vpack.c.b16 %v1829, %v1827
    %v1942 = vpack.c.b16 %v1830, %v1828
    %v1943 = vpack.c.b16 %v1833, %v1831
    %v1944 = vpack.c.b16 %v1834, %v1832
    %v1945 = vpack.c.b16 %v1837, %v1835
    %v1946 = vpack.c.b16 %v1838, %v1836
    %v1947 = vpack.c.b16 %v1841, %v1839
    %v1948 = vpack.c.b16 %v1842, %v1840
    %v1949 = vpack.c.b16 %v1845, %v1843
    %v1950 = vpack.c.b16 %v1846, %v1844
    %v1951 = vpack.c.b16 %v1849, %v1847
    %v1952 = vpack.c.b16 %v1850, %v1848
    %v1953 = vpack.c.b16 %v1853, %v1851
    %v1954 = vpack.c.b16 %v1854, %v1852
    %v1955 = vpack.c.b16 %v1857, %v1855
    %v1956 = vpack.c.b16 %v1858, %v1856
    %v1957 = vpack.c.b16 %v1861, %v1859
    %v1958 = vpack.c.b16 %v1862, %v1860
    %v1959 = vpack.c.b16 %v1865, %v1863
    %v1960 = vpack.c.b16 %v1866, %v1864
    %v1961 = vpack.c.b16 %v1869, %v1867
    %v1962 = vpack.c.b16 %v1870, %v1868
    %v1963 = vpack.c.b16 %v1873, %v1871
    %v1964 = vpack.c.b16 %v1874, %v1872
    %v1965 = vpack.c.b16 %v1877, %v1875
    %v1966 = vpack.c.b16 %v1878, %v1876
    %v1967 = vpack.c.b16 %v1881, %v1879
    %v1968 = vpack.c.b16 %v1882, %v1880
    %v1969 = vpack.c.b16 %v1885, %v1883
    %v1970 = vpack.c.b16 %v1886, %v1884
    %v1971 = vpack.c.b16 %v1889, %v1887
    %v1972 = vpack.c.b16 %v1890, %v1888
    %v1973 = vpack.c.b16 %v1893, %v1891
    %v1974 = vpack.c.b16 %v1894, %v1892
    %v1975 = vpack.c.b16 %v1897, %v1895
    %v1976 = vpack.c.b16 %v1898, %v1896
    %v1977 = vpack.c.b16 %v1901, %v1899
    %v1978 = vpack.c.b16 %v1902, %v1900
    %v1979 = vpack.c.b16 %v1905, %v1903
    %v1980 = vpack.c.b16 %v1906, %v1904
    %v1981 = vpack.c.b16 %v1909, %v1907
    %v1982 = vpack.c.b16 %v1910, %v1908
    %v1983 = vpack.c.b16 %v1913, %v1911
    %v1984 = vpack.c.b16 %v1914, %v1912
    %v1985 = vpack.c.b16 %v1917, %v1915
    %v1986 = vpack.c.b16 %v1918, %v1916
    %v1987 = vpack.c.b16 %v1921, %v1919
    %v1988 = vpack.c.b16 %v1922, %v1920
    %v1989 = vpack.c.b16 %v1925, %v1923
    %v1990 = vpack.c.b16 %v1926, %v1924
    %2055 = vmatprep.subr.bf16.mxu0 %v1942
    %2056 = vmatpush1.bf16.msra.mxu0 %v1941
    %2057 = vmatprep.subr.bf16.mxu0 %v1940
    %2058 = vmatpush1.bf16.msra.mxu0 %v1939
    %2059 = vmatprep.subr.bf16.mxu0 %v1938
    %2060 = vmatpush1.bf16.msra.mxu0 %v1937
    %2061 = vmatprep.subr.bf16.mxu0 %v1936
    %2062 = vmatpush1.bf16.msra.mxu0 %v1935
    %2063 = vmatprep.subr.bf16.mxu0 %v1934
    %2064 = vmatpush1.bf16.msra.mxu0 %v1933
    %2065 = vmatprep.subr.bf16.mxu0 %v1932
    %2066 = vmatpush1.bf16.msra.mxu0 %v1931
    %2067 = vmatprep.subr.bf16.mxu0 %v1930
    %2068 = vmatpush1.bf16.msra.mxu0 %v1929
    %2069 = vmatprep.subr.bf16.mxu0 %v1928
    %2070 = vmatpush1.bf16.msra.mxu0 %v1927
    %2071 = vmatprep.subr.bf16.mxu0 %v1958
    %2072 = vmatpush2.bf16.msra.mxu0 %v1957
    %2073 = vmatprep.subr.bf16.mxu0 %v1956
    %2074 = vmatpush2.bf16.msra.mxu0 %v1955
    %2075 = vmatprep.subr.bf16.mxu0 %v1954
    %2076 = vmatpush2.bf16.msra.mxu0 %v1953
    %2077 = vmatprep.subr.bf16.mxu0 %v1952
    %2078 = vmatpush2.bf16.msra.mxu0 %v1951
    %2079 = vmatprep.subr.bf16.mxu0 %v1950
    %2080 = vmatpush2.bf16.msra.mxu0 %v1949
    %2081 = vmatprep.subr.bf16.mxu0 %v1948
    %2082 = vmatpush2.bf16.msra.mxu0 %v1947
    %2083 = vmatprep.subr.bf16.mxu0 %v1946
    %2084 = vmatpush2.bf16.msra.mxu0 %v1945
    %2085 = vmatprep.subr.bf16.mxu0 %v1944
    %2086 = vmatpush2.bf16.msra.mxu0 %v1943
    %2087 = vmatprep.mubr.bf16.mxu0 %v1656
    %2088 = vmatmul.mubr.bf16.gmra.mxu0 %v1655
    %v2089 = vpop.f32.mrf.mxu0
    %v2090 = vadd.f32 %v1728, %v2089
    %v2091 = vpop.f32.mrf.mxu0
    %v2092 = vadd.f32 %v1732, %v2091
    %v2093 = vpop.f32.mrf.mxu0
    %v2094 = vpop.f32.mrf.mxu0
    %2095 = vdwg.mxu0
    %2096 = vmatprep.subr.bf16.mxu0 %v1974
    %2097 = vmatpush1.bf16.msra.mxu0 %v1973
    %2098 = vmatprep.subr.bf16.mxu0 %v1972
    %2099 = vmatpush1.bf16.msra.mxu0 %v1971
    %2100 = vmatprep.subr.bf16.mxu0 %v1970
    %2101 = vmatpush1.bf16.msra.mxu0 %v1969
    %2102 = vmatprep.subr.bf16.mxu0 %v1968
    %2103 = vmatpush1.bf16.msra.mxu0 %v1967
    %2104 = vmatprep.subr.bf16.mxu0 %v1966
    %2105 = vmatpush1.bf16.msra.mxu0 %v1965
    %2106 = vmatprep.subr.bf16.mxu0 %v1964
    %2107 = vmatpush1.bf16.msra.mxu0 %v1963
    %2108 = vmatprep.subr.bf16.mxu0 %v1962
    %2109 = vmatpush1.bf16.msra.mxu0 %v1961
    %2110 = vmatprep.subr.bf16.mxu0 %v1960
    %2111 = vmatpush1.bf16.msra.mxu0 %v1959
    %2112 = vmatprep.subr.bf16.mxu0 %v1990
    %2113 = vmatpush2.bf16.msra.mxu0 %v1989
    %2114 = vmatprep.subr.bf16.mxu0 %v1988
    %2115 = vmatpush2.bf16.msra.mxu0 %v1987
    %2116 = vmatprep.subr.bf16.mxu0 %v1986
    %2117 = vmatpush2.bf16.msra.mxu0 %v1985
    %2118 = vmatprep.subr.bf16.mxu0 %v1984
    %2119 = vmatpush2.bf16.msra.mxu0 %v1983
    %2120 = vmatprep.subr.bf16.mxu0 %v1982
    %2121 = vmatpush2.bf16.msra.mxu0 %v1981
    %2122 = vmatprep.subr.bf16.mxu0 %v1980
    %2123 = vmatpush2.bf16.msra.mxu0 %v1979
    %2124 = vmatprep.subr.bf16.mxu0 %v1978
    %2125 = vmatpush2.bf16.msra.mxu0 %v1977
    %2126 = vmatprep.subr.bf16.mxu0 %v1976
    %2127 = vmatpush2.bf16.msra.mxu0 %v1975
    %2128 = vmatprep.mubr.bf16.mxu0 %v1658
    %2129 = vmatmul.mubr.bf16.gmra.mxu0 %v1657
    %v2130 = vpop.f32.mrf.mxu0
    %v2131 = vadd.f32 %v2090, %v2130
    %v2132 = vpop.f32.mrf.mxu0
    %v2133 = vadd.f32 %v2092, %v2132
    %v2134 = vpop.f32.mrf.mxu0
    %v2135 = vpop.f32.mrf.mxu0
    %2136 = vdwg.mxu0
    %v2137 = vmax.f32 %v2131, 0.0
    %v2138 = vmax.f32 %v2133, 0.0
    %v2139 = vpack.c.bf16 %v2137, %v2137
    %v2140 = vpack.c.bf16 %v2138, %v2138
    %v2141 = vld [vmem:[#allocation8] sm:$0xf]
    %v2142 = vld [vmem:[#allocation8 + $0x4] sm:$0xf]
    %v2143 = vld [vmem:[#allocation8 + $0x8] sm:$0xf]
    %v2144 = vld [vmem:[#allocation8 + $0xc] sm:$0xf]
    %v2145 = vld [vmem:[#allocation8 + $0x10] sm:$0xf]
    %v2146 = vld [vmem:[#allocation8 + $0x14] sm:$0xf]
    %v2147 = vld [vmem:[#allocation8 + $0x18] sm:$0xf]
    %v2148 = vld [vmem:[#allocation8 + $0x1c] sm:$0xf]
    %v2149 = vld [vmem:[#allocation8 + $0x20] sm:$0xf]
    %v2150 = vld [vmem:[#allocation8 + $0x24] sm:$0xf]
    %v2151 = vld [vmem:[#allocation8 + $0x28] sm:$0xf]
    %v2152 = vld [vmem:[#allocation8 + $0x2c] sm:$0xf]
    %v2153 = vld [vmem:[#allocation8 + $0x30] sm:$0xf]
    %v2154 = vld [vmem:[#allocation8 + $0x34] sm:$0xf]
    %v2155 = vld [vmem:[#allocation8 + $0x38] sm:$0xf]
    %v2156 = vld [vmem:[#allocation8 + $0x3c] sm:$0xf]
    %v2157 = vld [vmem:[#allocation8 + $0x40] sm:$0xf]
    %v2158 = vld [vmem:[#allocation8 + $0x44] sm:$0xf]
    %v2159 = vld [vmem:[#allocation8 + $0x48] sm:$0xf]
    %v2160 = vld [vmem:[#allocation8 + $0x4c] sm:$0xf]
    %v2161 = vld [vmem:[#allocation8 + $0x50] sm:$0xf]
    %v2162 = vld [vmem:[#allocation8 + $0x54] sm:$0xf]
    %v2163 = vld [vmem:[#allocation8 + $0x58] sm:$0xf]
    %v2164 = vld [vmem:[#allocation8 + $0x5c] sm:$0xf]
    %v2165 = vld [vmem:[#allocation8 + $0x60] sm:$0xf]
    %v2166 = vld [vmem:[#allocation8 + $0x64] sm:$0xf]
    %v2167 = vld [vmem:[#allocation8 + $0x68] sm:$0xf]
    %v2168 = vld [vmem:[#allocation8 + $0x6c] sm:$0xf]
    %v2169 = vld [vmem:[#allocation8 + $0x70] sm:$0xf]
    %v2170 = vld [vmem:[#allocation8 + $0x74] sm:$0xf]
    %v2171 = vld [vmem:[#allocation8 + $0x78] sm:$0xf]
    %v2172 = vld [vmem:[#allocation8 + $0x7c] sm:$0xf]
    %v2173 = vld [vmem:[%s6] sm:$0x1]
    %v2175 = vlaneseq
    %v2176 = vshrl.u32 %v2175, 7
    %v2177 = vsub.s32 0, %v2176
    %v2178 = vrot.slane %v2173, %v2177
    %v2212 = vunpack.c.l.b16 %v2141
    %v2213 = vunpack.c.l.b16 %v2142
    %v2214 = vunpack.c.l.b16 %v2143
    %v2215 = vunpack.c.l.b16 %v2144
    %v2216 = vunpack.c.l.b16 %v2145
    %v2217 = vunpack.c.l.b16 %v2146
    %v2218 = vunpack.c.l.b16 %v2147
    %v2219 = vunpack.c.l.b16 %v2148
    %v2220 = vunpack.c.l.b16 %v2149
    %v2221 = vunpack.c.l.b16 %v2150
    %v2222 = vunpack.c.l.b16 %v2151
    %v2223 = vunpack.c.l.b16 %v2152
    %v2224 = vunpack.c.l.b16 %v2153
    %v2225 = vunpack.c.l.b16 %v2154
    %v2226 = vunpack.c.l.b16 %v2155
    %v2227 = vunpack.c.l.b16 %v2156
    %v2228 = vunpack.c.l.b16 %v2157
    %v2229 = vunpack.c.l.b16 %v2158
    %v2230 = vunpack.c.l.b16 %v2159
    %v2231 = vunpack.c.l.b16 %v2160
    %v2232 = vunpack.c.l.b16 %v2161
    %v2233 = vunpack.c.l.b16 %v2162
    %v2234 = vunpack.c.l.b16 %v2163
    %v2235 = vunpack.c.l.b16 %v2164
    %v2236 = vunpack.c.l.b16 %v2165
    %v2237 = vunpack.c.l.b16 %v2166
    %v2238 = vunpack.c.l.b16 %v2167
    %v2239 = vunpack.c.l.b16 %v2168
    %v2240 = vunpack.c.l.b16 %v2169
    %v2241 = vunpack.c.l.b16 %v2170
    %v2242 = vunpack.c.l.b16 %v2171
    %v2243 = vunpack.c.l.b16 %v2172
    %v2244 = vpack.c.b16 %v2213, %v2212
    %v2245 = vpack.c.b16 %v2215, %v2214
    %v2246 = vpack.c.b16 %v2217, %v2216
    %v2247 = vpack.c.b16 %v2219, %v2218
    %v2248 = vpack.c.b16 %v2221, %v2220
    %v2249 = vpack.c.b16 %v2223, %v2222
    %v2250 = vpack.c.b16 %v2225, %v2224
    %v2251 = vpack.c.b16 %v2227, %v2226
    %v2252 = vpack.c.b16 %v2229, %v2228
    %v2253 = vpack.c.b16 %v2231, %v2230
    %v2254 = vpack.c.b16 %v2233, %v2232
    %v2255 = vpack.c.b16 %v2235, %v2234
    %v2256 = vpack.c.b16 %v2237, %v2236
    %v2257 = vpack.c.b16 %v2239, %v2238
    %v2258 = vpack.c.b16 %v2241, %v2240
    %v2259 = vpack.c.b16 %v2243, %v2242
    %2276 = vmatprep.subr.bf16.mxu0 0
    %2277 = vmatpush1.bf16.msra.mxu0 %v2251
    %2278 = vmatprep.subr.bf16.mxu0 0
    %2279 = vmatpush1.bf16.msra.mxu0 %v2250
    %2280 = vmatprep.subr.bf16.mxu0 0
    %2281 = vmatpush1.bf16.msra.mxu0 %v2249
    %2282 = vmatprep.subr.bf16.mxu0 0
    %2283 = vmatpush1.bf16.msra.mxu0 %v2248
    %2284 = vmatprep.subr.bf16.mxu0 0
    %2285 = vmatpush1.bf16.msra.mxu0 %v2247
    %2286 = vmatprep.subr.bf16.mxu0 0
    %2287 = vmatpush1.bf16.msra.mxu0 %v2246
    %2288 = vmatprep.subr.bf16.mxu0 0
    %2289 = vmatpush1.bf16.msra.mxu0 %v2245
    %2290 = vmatprep.subr.bf16.mxu0 0
    %2291 = vmatpush1.bf16.msra.mxu0 %v2244
    %2292 = vmatprep.subr.bf16.mxu0 0
    %2293 = vmatpush2.bf16.msra.mxu0 %v2259
    %2294 = vmatprep.subr.bf16.mxu0 0
    %2295 = vmatpush2.bf16.msra.mxu0 %v2258
    %2296 = vmatprep.subr.bf16.mxu0 0
    %2297 = vmatpush2.bf16.msra.mxu0 %v2257
    %2298 = vmatprep.subr.bf16.mxu0 0
    %2299 = vmatpush2.bf16.msra.mxu0 %v2256
    %2300 = vmatprep.subr.bf16.mxu0 0
    %2301 = vmatpush2.bf16.msra.mxu0 %v2255
    %2302 = vmatprep.subr.bf16.mxu0 0
    %2303 = vmatpush2.bf16.msra.mxu0 %v2254
    %2304 = vmatprep.subr.bf16.mxu0 0
    %2305 = vmatpush2.bf16.msra.mxu0 %v2253
    %2306 = vmatprep.subr.bf16.mxu0 0
    %2307 = vmatpush2.bf16.msra.mxu0 %v2252
    %2308 = vmatprep.mubr.bf16.mxu0 %v2140
    %2309 = vmatmul.mubr.bf16.gmra.mxu0 %v2139
    %v2310 = vpop.f32.mrf.mxu0
    %v2311 = vadd.f32 %v2178, %v2310
    %v2312 = vpop.f32.mrf.mxu0
    %v2313 = vpop.f32.mrf.mxu0
    %v2314 = vpop.f32.mrf.mxu0
    %2315 = vdwg.mxu0
    %v2316 = vmax.f32 %v2311, 0.0
    %v2317 = vpack.c.bf16 %v2316, %v2316
    %v2318 = vld [vmem:[#allocation10] sm:$0xf]
    %v2319 = vld [vmem:[#allocation10 + $0x4] sm:$0xf]
    %v2320 = vld [vmem:[#allocation10 + $0x8] sm:$0xf]
    %v2321 = vld [vmem:[#allocation10 + $0xc] sm:$0xf]
    %v2322 = vld [vmem:[#allocation10 + $0x10] sm:$0xf]
    %v2323 = vld [vmem:[#allocation10 + $0x14] sm:$0xf]
    %v2324 = vld [vmem:[#allocation10 + $0x18] sm:$0xf]
    %v2325 = vld [vmem:[#allocation10 + $0x1c] sm:$0xf]
    %v2326 = vld [vmem:[#allocation10 + $0x20] sm:$0xf]
    %v2327 = vld [vmem:[#allocation10 + $0x24] sm:$0xf]
    %v2328 = vld [vmem:[#allocation10 + $0x28] sm:$0xf]
    %v2329 = vld [vmem:[#allocation10 + $0x2c] sm:$0xf]
    %v2330 = vld [vmem:[#allocation10 + $0x30] sm:$0xf]
    %v2331 = vld [vmem:[#allocation10 + $0x34] sm:$0xf]
    %v2332 = vld [vmem:[#allocation10 + $0x38] sm:$0xf]
    %v2333 = vld [vmem:[#allocation10 + $0x3c] sm:$0xf]
    %v2334 = vld [vmem:[%s8] sm:$0x1]
    %v2336 = vlaneseq
    %v2337 = vshrl.u32 %v2336, 7
    %v2338 = vsub.s32 0, %v2337
    %v2339 = vrot.slane %v2334, %v2338
    %v2357 = vunpack.c.l.b16 %v2318
    %v2358 = vunpack.c.l.b16 %v2319
    %v2359 = vunpack.c.l.b16 %v2320
    %v2360 = vunpack.c.l.b16 %v2321
    %v2361 = vunpack.c.l.b16 %v2322
    %v2362 = vunpack.c.l.b16 %v2323
    %v2363 = vunpack.c.l.b16 %v2324
    %v2364 = vunpack.c.l.b16 %v2325
    %v2365 = vunpack.c.l.b16 %v2326
    %v2366 = vunpack.c.l.b16 %v2327
    %v2367 = vunpack.c.l.b16 %v2328
    %v2368 = vunpack.c.l.b16 %v2329
    %v2369 = vunpack.c.l.b16 %v2330
    %v2370 = vunpack.c.l.b16 %v2331
    %v2371 = vunpack.c.l.b16 %v2332
    %v2372 = vunpack.c.l.b16 %v2333
    %v2373 = vpack.c.b16 %v2358, %v2357
    %v2374 = vpack.c.b16 %v2360, %v2359
    %v2375 = vpack.c.b16 %v2362, %v2361
    %v2376 = vpack.c.b16 %v2364, %v2363
    %v2377 = vpack.c.b16 %v2366, %v2365
    %v2378 = vpack.c.b16 %v2368, %v2367
    %v2379 = vpack.c.b16 %v2370, %v2369
    %v2380 = vpack.c.b16 %v2372, %v2371
    %2389 = vmatprep.subr.bf16.mxu0 0
    %2390 = vmatpush1.bf16.msra.mxu0 %v2380
    %2391 = vmatprep.subr.bf16.mxu0 0
    %2392 = vmatpush1.bf16.msra.mxu0 %v2379
    %2393 = vmatprep.subr.bf16.mxu0 0
    %2394 = vmatpush1.bf16.msra.mxu0 %v2378
    %2395 = vmatprep.subr.bf16.mxu0 0
    %2396 = vmatpush1.bf16.msra.mxu0 %v2377
    %2397 = vmatprep.subr.bf16.mxu0 0
    %2398 = vmatpush1.bf16.msra.mxu0 %v2376
    %2399 = vmatprep.subr.bf16.mxu0 0
    %2400 = vmatpush1.bf16.msra.mxu0 %v2375
    %2401 = vmatprep.subr.bf16.mxu0 0
    %2402 = vmatpush1.bf16.msra.mxu0 %v2374
    %2403 = vmatprep.subr.bf16.mxu0 0
    %2404 = vmatpush1.bf16.msra.mxu0 %v2373
    %2405 = vmatprep.subr.bf16.mxu0 0
    %2406 = vmatpush2.bf16.msra.mxu0 0
    %2407 = vmatprep.subr.bf16.mxu0 0
    %2408 = vmatpush2.bf16.msra.mxu0 0
    %2409 = vmatprep.subr.bf16.mxu0 0
    %2410 = vmatpush2.bf16.msra.mxu0 0
    %2411 = vmatprep.subr.bf16.mxu0 0
    %2412 = vmatpush2.bf16.msra.mxu0 0
    %2413 = vmatprep.subr.bf16.mxu0 0
    %2414 = vmatpush2.bf16.msra.mxu0 0
    %2415 = vmatprep.subr.bf16.mxu0 0
    %2416 = vmatpush2.bf16.msra.mxu0 0
    %2417 = vmatprep.subr.bf16.mxu0 0
    %2418 = vmatpush2.bf16.msra.mxu0 0
    %2419 = vmatprep.subr.bf16.mxu0 0
    %2420 = vmatpush2.bf16.msra.mxu0 0
    %2421 = vmatprep.mubr.bf16.mxu0 0
    %2422 = vmatmul.mubr.bf16.gmra.mxu0 %v2317
    %v2423 = vpop.f32.mrf.mxu0
    %v2424 = vadd.f32 %v2339, %v2423
    %v2425 = vpop.f32.mrf.mxu0
    %v2426 = vpop.f32.mrf.mxu0
    %v2427 = vpop.f32.mrf.mxu0
    %2428 = vdwg.mxu0
    %v2429 = vmax.f32 %v2424, 0.0
    %v2430 = vpack.c.bf16 %v2429, %v2429
    %v2431 = vunpack.c.l.bf16 %v2430
    %v2432 = vld [vmem:[%s9] sm:$0x1]
    %v2434 = vlaneseq
    %v2435 = vshrl.u32 %v2434, 7
    %v2436 = vsub.s32 0, %v2435
    %v2437 = vrot.slane %v2432, %v2436
    %v2439 = vmul.f32 %v2431, %v2437
    %2440 = vadd.xlane.f32.xlu0 %v2439
    %v2441 = vpop.xlane.xlu0 %2440
    %v2442 = vld [vmem:[#allocation2] sm:$0x1]
    %v2444 = vlaneseq
    %v2445 = vshrl.u32 %v2444, 7
    %v2446 = vsub.s32 0, %v2445
    %v2447 = vrot.slane %v2442, %v2446
    %v2449 = vadd.f32 %v2441, %v2447
    %v2450 = vxor.u32 %v2449, 2147483648
    %v2451 = vmul.f32 %v2450, 1.442695
    %v2452 = vpow.pop %v2451
    %v2453 = vadd.f32 %v2452, 1.0
    %v2454 = vrcp.pop %v2453
    %v2455 = vmul.f32 1.0, %v2454
    %vm2456 = vcmask 7168
    %2457 = vst.msk [vmem:[%s11] sm:$0xff] %vm2456, %v2455
    // Predicated region
    $region66: #{tpu_custom_call.1} parent=1 // pred_check
      _
    $region67: #{tpu_custom_call.1} parent=1 // pred_check_branch
      %2459 = sbr.rel (0) target = $region69
    $region68: #{tpu_custom_call.1} parent=1 // pred_region
      _
    $region69: #{tpu_custom_call.1} parent=1 // pred_fallthru
      _
    // Predicated region
    $region70: #{tpu_custom_call.1} parent=1 // pred_check
      _
    $region71: #{tpu_custom_call.1} parent=1 // pred_check_branch
      %2461 = sbr.rel (0) target = $region73
    $region72: #{tpu_custom_call.1} parent=1 // pred_region
      _
    $region73: #{tpu_custom_call.1} parent=1 // pred_fallthru
      _
    %2462 = vsyncpa [#allocation4], 1
    %2463 = vsyncpa [#allocation6], 1
    %2464 = vsyncpa [#allocation9], 1

</llo_original>
